<compile_context>
chip_gen: v7x
topology: tpu7x:2x2x1
jax: 0.10.0
libtpu: 0.0.40
codegen_flags: <defaults>
</compile_context>

<pallas_src>
import jax
import jax.numpy as jnp
from jax.experimental import pallas as pl
from jax.experimental.pallas import tpu as pltpu

INPUT_SIZE = 3
HIDDEN_SIZE = 64
NUM_LAYERS = 2
OUTPUT_SIZE = 1


def lstm_kernel(add_ref, wf_ref, fcw_ref, fcb_ref, out_ref):
    """Wavefront-fused 2-layer LSTM recurrence + final FC.

    add_ref : (T+1, B, 8H) f32  per-step additive term, packed gate layout
                                 [i0 i1 | f0 f1 | o0 o1 | g0 g1]
                                 (layer-0 half = x(t)@W_ih0^T + b_ih0 + b_hh0,
                                  layer-1 half = b_ih1 + b_hh1; zeroed at the
                                  wavefront boundaries).
    wf_ref  : (2H, 8H)  bf16    fused recurrent weight, rows = packed [h0 | h1].
    fcw_ref : (2H, O)   f32     fc.weight^T zero-padded over the h0 lanes.
    fcb_ref : (1, O)    f32     fc.bias.
    out_ref : (B, O)    f32
    """
    B = out_ref.shape[0]
    H2 = wf_ref.shape[0]          # 2H = 128  (packed [layer0 | layer1] width)
    S = add_ref.shape[0]          # T + 1 wavefront steps (static)

    def packed_cell(g, c):
        # Gate lane layout [i0 i1 | f0 f1 | o0 o1 | g0 g1]: every slice below is
        # a 128-lane (vreg-aligned) slab, and one sigmoid + one tanh cover both
        # layers' gates at once.
        sig = jax.nn.sigmoid(g[:, :3 * H2])
        i_g = sig[:, 0 * H2:1 * H2]
        f_g = sig[:, 1 * H2:2 * H2]
        o_g = sig[:, 2 * H2:3 * H2]
        c_hat = jnp.tanh(g[:, 3 * H2:4 * H2])
        c_new = f_g * c + i_g * c_hat
        h_new = o_g * jnp.tanh(c_new)
        return h_new, c_new

    # Wavefront step 0: packed state is all-zero, so the recurrent matmul would
    # contribute nothing -- skip it and feed the additive term straight in.
    # (add[0]'s layer-1 half is zero, which keeps h1 = c1 = 0 after this step.)
    h, c = packed_cell(add_ref[0], jnp.zeros((B, H2), jnp.float32))

    # Wavefront steps 1..T: one (B,2H)@(2H,8H) bf16 matmul yields layer-0 gates
    # for time s AND layer-1 gates for time s-1.  S is tiny and static: fully
    # unroll so the scheduler can fill MXU/EUP bubbles.  The weight ref is
    # re-read per step (not hoisted into a long-lived value) to keep vreg
    # pressure low under unrolling; the bias/broadcast work is pre-folded into
    # add_ref, so nothing loop-invariant is recomputed here.
    for s in range(1, S):
        g = (jnp.dot(h.astype(jnp.bfloat16), wf_ref[...],
                     preferred_element_type=jnp.float32)
             + add_ref[s])
        h, c = packed_cell(g, c)

    # Lanes H: of h now hold h1(T-1); fcw has zero rows for the layer-0 lanes so
    # the packed state feeds the FC matmul directly (no mid-vreg slice).
    out_ref[...] = (jnp.dot(h, fcw_ref[...], preferred_element_type=jnp.float32)
                    + fcb_ref[...])


def init_params(key, input_size, hidden_size, output_size):
    """Deterministic init mirroring PyTorch's U(-1/sqrt(H), 1/sqrt(H))."""
    k = 1.0 / jnp.sqrt(hidden_size)
    keys = jax.random.split(key, 11)
    u = lambda kk, shape: jax.random.uniform(kk, shape, jnp.float32, -k, k)
    return {
        "w_ih0": u(keys[0], (4 * hidden_size, input_size)),
        "w_hh0": u(keys[1], (4 * hidden_size, hidden_size)),
        "b_ih0": u(keys[2], (4 * hidden_size,)),
        "b_hh0": u(keys[3], (4 * hidden_size,)),
        "w_ih1": u(keys[4], (4 * hidden_size, hidden_size)),
        "w_hh1": u(keys[5], (4 * hidden_size, hidden_size)),
        "b_ih1": u(keys[6], (4 * hidden_size,)),
        "b_hh1": u(keys[7], (4 * hidden_size,)),
        "fc_w": u(keys[8], (output_size, hidden_size)),
        "fc_b": u(keys[9], (output_size,)),
    }


def lstm_forward(x, p):
    """x: (B, T, I) batch-first (PyTorch convention). Returns (B, O)."""
    B, T, I = x.shape
    H = HIDDEN_SIZE
    H2 = 2 * H
    O = OUTPUT_SIZE
    f32 = jnp.float32

    def reord(a):
        # PyTorch gate order [i, f, g, o] -> [i, f, o, g] along the last 4H axis.
        return jnp.concatenate([a[..., 0:H], a[..., H:2 * H],
                                a[..., 3 * H:4 * H], a[..., 2 * H:3 * H]], axis=-1)

    def interleave_gates(l0, l1):
        # (..., 4H) layer-0 and (..., 4H) layer-1 -> (..., 8H) packed layout
        # [i0 i1 | f0 f1 | o0 o1 | g0 g1] (each gate slab H wide, pairs 2H=128).
        lead = l0.shape[:-1]
        stacked = jnp.stack([l0.reshape(lead + (4, H)),
                             l1.reshape(lead + (4, H))], axis=-2)
        return stacked.reshape(lead + (8 * H,))

    # ---- fused recurrent weight (built once in XLA) --------------------------
    # rows 0:H  <- contributions of h0(s-1); rows H:2H <- contributions of h1(s-2).
    # Layer-0 gate columns see only W_hh0; layer-1 columns see [W_ih1 ; W_hh1].
    whh0T = reord(p["w_hh0"].T)                        # (H, 4H)
    wih1T = reord(p["w_ih1"].T)                        # (H, 4H)
    whh1T = reord(p["w_hh1"].T)                        # (H, 4H)
    zHH = jnp.zeros((H, 4 * H), f32)
    w_fused = jnp.concatenate(
        [interleave_gates(whh0T, wih1T),               # h0 rows
         interleave_gates(zHH, whh1T)], axis=0         # h1 rows
    ).astype(jnp.bfloat16)                             # (2H, 8H) bf16 MXU operand

    # ---- per-wavefront-step additive terms ------------------------------------
    # Layer-0 input projection has no recurrence: compute it here so XLA fuses it
    # with the layout work and the kernel starts straight on the serial chain.
    xw0 = reord(jnp.einsum("bti,hi->tbh", x.astype(f32), p["w_ih0"])
                + p["b_ih0"] + p["b_hh0"])             # (T, B, 4H) order [i,f,o,g]
    b1 = reord(p["b_ih1"] + p["b_hh1"])                # (4H,)      order [i,f,o,g]

    # Wavefront step s: layer-0 runs time s (needs xw0[s]); layer-1 runs time s-1
    # (needs b1).  Step 0 has no layer-1 work (zeros there keep h1=c1=0) and step
    # T has no layer-0 work (its result is never read).
    l0_add = jnp.concatenate([xw0, jnp.zeros((1, B, 4 * H), f32)], axis=0)
    l1_add = jnp.concatenate([jnp.zeros((1, B, 4 * H), f32),
                              jnp.broadcast_to(b1, (T, B, 4 * H))], axis=0)
    add = interleave_gates(l0_add, l1_add)             # (T+1, B, 8H) f32

    # ---- final FC, padded so it consumes the packed state directly -----------
    fcw_pad = jnp.concatenate([jnp.zeros((H, O), f32),
                               p["fc_w"].T.astype(f32)], axis=0)   # (2H, O)
    fcb = p["fc_b"].astype(f32)[None, :]                           # (1, O)

    args = (add, w_fused, fcw_pad, fcb)

    flops = T * 2 * B * H2 * 8 * H + 2 * B * H2 * O
    transcendentals = (T + 1) * B * 5 * H2
    bytes_accessed = (sum(int(a.size) * a.dtype.itemsize for a in args)
                      + B * O * 4)

    vmem = pl.BlockSpec(memory_space=pltpu.MemorySpace.VMEM)
    return pl.pallas_call(
        lstm_kernel,
        out_shape=jax.ShapeDtypeStruct((B, O), jnp.float32),
        in_specs=[vmem] * len(args),
        out_specs=vmem,
        cost_estimate=pl.CostEstimate(flops=flops,
                                      transcendentals=transcendentals,
                                      bytes_accessed=bytes_accessed),
    )(*args)


def lstm_reference(x, p):
    """Pure-JAX f32 reference (PyTorch gate order, unpermuted params)."""
    B, T, _ = x.shape
    H = HIDDEN_SIZE

    def cell(x_t, h, c, wih, whh, bih, bhh):
        g = x_t @ wih.T + bih + h @ whh.T + bhh
        i = jax.nn.sigmoid(g[:, 0 * H:1 * H])
        f = jax.nn.sigmoid(g[:, 1 * H:2 * H])
        gg = jnp.tanh(g[:, 2 * H:3 * H])
        o = jax.nn.sigmoid(g[:, 3 * H:4 * H])
        c = f * c + i * gg
        return o * jnp.tanh(c), c

    h0 = c0 = h1 = c1 = jnp.zeros((B, H), jnp.float32)
    for t in range(T):
        h0, c0 = cell(x[:, t, :], h0, c0, p["w_ih0"], p["w_hh0"],
                      p["b_ih0"], p["b_hh0"])
        h1, c1 = cell(h0, h1, c1, p["w_ih1"], p["w_hh1"],
                      p["b_ih1"], p["b_hh1"])
    return h1 @ p["fc_w"].T + p["fc_b"]


if __name__ == "__main__":
    key = jax.random.PRNGKey(0)
    k_param, k_x = jax.random.split(key)

    batch, seq = 2, 8
    x = jax.random.normal(k_x, (batch, seq, INPUT_SIZE), jnp.float32)
    params = init_params(k_param, INPUT_SIZE, HIDDEN_SIZE, OUTPUT_SIZE)

    y = jax.block_until_ready(lstm_forward(x, params))
    y_ref = lstm_reference(x, params)

    assert y.shape == (batch, OUTPUT_SIZE)
    # Recurrent matmuls use bf16 MXU operands (f32 accumulation), so the check
    # against the pure-f32 reference uses a correspondingly loosened tolerance.
    assert jnp.allclose(y, y_ref, atol=3e-2, rtol=3e-2), (y, y_ref)
    print("KERNEL_OK")
</pallas_src>

<mosaic_0001>
module attributes {stable_mosaic.version = 11 : i64} {
  func.func @lstm_kernel(%arg0: memref<9x2x512xf32, #tpu.memory_space<vmem>>, %arg1: memref<128x512xbf16, #tpu.memory_space<vmem>>, %arg2: memref<128x1xf32, #tpu.memory_space<vmem>>, %arg3: memref<1x1xf32, #tpu.memory_space<vmem>>, %arg4: memref<2x1xf32, #tpu.memory_space<vmem>>) attributes {dimension_semantics = [], scalar_prefetch = 0 : i64, scratch_operands = 0 : i64, tpu.core_type = #tpu.core_type<tc>} {
    %c0 = arith.constant 0 : index
    %c0_0 = arith.constant 0 : index
    %c0_1 = arith.constant 0 : index
    %0 = vector.load %arg0[%c0, %c0_0, %c0_1] : memref<9x2x512xf32, #tpu.memory_space<vmem>>, vector<1x2x512xf32>
    %1 = vector.shape_cast %0 : vector<1x2x512xf32> to vector<2x512xf32>
    %cst = arith.constant 0.000000e+00 : f32
    %2 = vector.broadcast %cst : f32 to vector<2x128xf32>
    %3 = vector.extract_strided_slice %1 {offsets = [0, 0], sizes = [2, 384], strides = [1, 1]} : vector<2x512xf32> to vector<2x384xf32>
    %4 = arith.negf %3 : vector<2x384xf32>
    %5 = math.exp %4 : vector<2x384xf32>
    %cst_2 = arith.constant 1.000000e+00 : f32
    %6 = vector.broadcast %cst_2 : f32 to vector<2x384xf32>
    %7 = arith.addf %6, %5 : vector<2x384xf32>
    %8 = arith.divf %6, %7 : vector<2x384xf32>
    %9 = vector.extract_strided_slice %8 {offsets = [0, 0], sizes = [2, 128], strides = [1, 1]} : vector<2x384xf32> to vector<2x128xf32>
    %10 = vector.extract_strided_slice %8 {offsets = [0, 128], sizes = [2, 128], strides = [1, 1]} : vector<2x384xf32> to vector<2x128xf32>
    %11 = vector.extract_strided_slice %8 {offsets = [0, 256], sizes = [2, 128], strides = [1, 1]} : vector<2x384xf32> to vector<2x128xf32>
    %12 = vector.extract_strided_slice %1 {offsets = [0, 384], sizes = [2, 128], strides = [1, 1]} : vector<2x512xf32> to vector<2x128xf32>
    %13 = math.tanh %12 : vector<2x128xf32>
    %14 = arith.mulf %10, %2 : vector<2x128xf32>
    %15 = arith.mulf %9, %13 : vector<2x128xf32>
    %16 = arith.addf %14, %15 : vector<2x128xf32>
    %17 = math.tanh %16 : vector<2x128xf32>
    %18 = arith.mulf %11, %17 : vector<2x128xf32>
    %19 = arith.truncf %18 : vector<2x128xf32> to vector<2x128xbf16>
    %c0_3 = arith.constant 0 : index
    %c0_4 = arith.constant 0 : index
    %20 = vector.load %arg1[%c0_3, %c0_4] : memref<128x512xbf16, #tpu.memory_space<vmem>>, vector<128x512xbf16>
    %cst_5 = arith.constant dense<0.000000e+00> : vector<2x512xf32>
    %21 = tpu.matmul %19, %20, %cst_5 {dimension_numbers = #tpu.dot_dimension_numbers<[1], [0], [0], [1], [0, 0, 1, 1], [], []>} : vector<2x128xbf16>, vector<128x512xbf16>, vector<2x512xf32> -> vector<2x512xf32>
    %c1 = arith.constant 1 : index
    %c0_6 = arith.constant 0 : index
    %c0_7 = arith.constant 0 : index
    %22 = vector.load %arg0[%c1, %c0_6, %c0_7] : memref<9x2x512xf32, #tpu.memory_space<vmem>>, vector<1x2x512xf32>
    %23 = vector.shape_cast %22 : vector<1x2x512xf32> to vector<2x512xf32>
    %24 = arith.addf %21, %23 : vector<2x512xf32>
    %25 = vector.extract_strided_slice %24 {offsets = [0, 0], sizes = [2, 384], strides = [1, 1]} : vector<2x512xf32> to vector<2x384xf32>
    %26 = arith.negf %25 : vector<2x384xf32>
    %27 = math.exp %26 : vector<2x384xf32>
    %cst_8 = arith.constant 1.000000e+00 : f32
    %28 = vector.broadcast %cst_8 : f32 to vector<2x384xf32>
    %29 = arith.addf %28, %27 : vector<2x384xf32>
    %30 = arith.divf %28, %29 : vector<2x384xf32>
    %31 = vector.extract_strided_slice %30 {offsets = [0, 0], sizes = [2, 128], strides = [1, 1]} : vector<2x384xf32> to vector<2x128xf32>
    %32 = vector.extract_strided_slice %30 {offsets = [0, 128], sizes = [2, 128], strides = [1, 1]} : vector<2x384xf32> to vector<2x128xf32>
    %33 = vector.extract_strided_slice %30 {offsets = [0, 256], sizes = [2, 128], strides = [1, 1]} : vector<2x384xf32> to vector<2x128xf32>
    %34 = vector.extract_strided_slice %24 {offsets = [0, 384], sizes = [2, 128], strides = [1, 1]} : vector<2x512xf32> to vector<2x128xf32>
    %35 = math.tanh %34 : vector<2x128xf32>
    %36 = arith.mulf %32, %16 : vector<2x128xf32>
    %37 = arith.mulf %31, %35 : vector<2x128xf32>
    %38 = arith.addf %36, %37 : vector<2x128xf32>
    %39 = math.tanh %38 : vector<2x128xf32>
    %40 = arith.mulf %33, %39 : vector<2x128xf32>
    %41 = arith.truncf %40 : vector<2x128xf32> to vector<2x128xbf16>
    %c0_9 = arith.constant 0 : index
    %c0_10 = arith.constant 0 : index
    %42 = vector.load %arg1[%c0_9, %c0_10] : memref<128x512xbf16, #tpu.memory_space<vmem>>, vector<128x512xbf16>
    %cst_11 = arith.constant dense<0.000000e+00> : vector<2x512xf32>
    %43 = tpu.matmul %41, %42, %cst_11 {dimension_numbers = #tpu.dot_dimension_numbers<[1], [0], [0], [1], [0, 0, 1, 1], [], []>} : vector<2x128xbf16>, vector<128x512xbf16>, vector<2x512xf32> -> vector<2x512xf32>
    %c2 = arith.constant 2 : index
    %c0_12 = arith.constant 0 : index
    %c0_13 = arith.constant 0 : index
    %44 = vector.load %arg0[%c2, %c0_12, %c0_13] : memref<9x2x512xf32, #tpu.memory_space<vmem>>, vector<1x2x512xf32>
    %45 = vector.shape_cast %44 : vector<1x2x512xf32> to vector<2x512xf32>
    %46 = arith.addf %43, %45 : vector<2x512xf32>
    %47 = vector.extract_strided_slice %46 {offsets = [0, 0], sizes = [2, 384], strides = [1, 1]} : vector<2x512xf32> to vector<2x384xf32>
    %48 = arith.negf %47 : vector<2x384xf32>
    %49 = math.exp %48 : vector<2x384xf32>
    %cst_14 = arith.constant 1.000000e+00 : f32
    %50 = vector.broadcast %cst_14 : f32 to vector<2x384xf32>
    %51 = arith.addf %50, %49 : vector<2x384xf32>
    %52 = arith.divf %50, %51 : vector<2x384xf32>
    %53 = vector.extract_strided_slice %52 {offsets = [0, 0], sizes = [2, 128], strides = [1, 1]} : vector<2x384xf32> to vector<2x128xf32>
    %54 = vector.extract_strided_slice %52 {offsets = [0, 128], sizes = [2, 128], strides = [1, 1]} : vector<2x384xf32> to vector<2x128xf32>
    %55 = vector.extract_strided_slice %52 {offsets = [0, 256], sizes = [2, 128], strides = [1, 1]} : vector<2x384xf32> to vector<2x128xf32>
    %56 = vector.extract_strided_slice %46 {offsets = [0, 384], sizes = [2, 128], strides = [1, 1]} : vector<2x512xf32> to vector<2x128xf32>
    %57 = math.tanh %56 : vector<2x128xf32>
    %58 = arith.mulf %54, %38 : vector<2x128xf32>
    %59 = arith.mulf %53, %57 : vector<2x128xf32>
    %60 = arith.addf %58, %59 : vector<2x128xf32>
    %61 = math.tanh %60 : vector<2x128xf32>
    %62 = arith.mulf %55, %61 : vector<2x128xf32>
    %63 = arith.truncf %62 : vector<2x128xf32> to vector<2x128xbf16>
    %c0_15 = arith.constant 0 : index
    %c0_16 = arith.constant 0 : index
    %64 = vector.load %arg1[%c0_15, %c0_16] : memref<128x512xbf16, #tpu.memory_space<vmem>>, vector<128x512xbf16>
    %cst_17 = arith.constant dense<0.000000e+00> : vector<2x512xf32>
    %65 = tpu.matmul %63, %64, %cst_17 {dimension_numbers = #tpu.dot_dimension_numbers<[1], [0], [0], [1], [0, 0, 1, 1], [], []>} : vector<2x128xbf16>, vector<128x512xbf16>, vector<2x512xf32> -> vector<2x512xf32>
    %c3 = arith.constant 3 : index
    %c0_18 = arith.constant 0 : index
    %c0_19 = arith.constant 0 : index
    %66 = vector.load %arg0[%c3, %c0_18, %c0_19] : memref<9x2x512xf32, #tpu.memory_space<vmem>>, vector<1x2x512xf32>
    %67 = vector.shape_cast %66 : vector<1x2x512xf32> to vector<2x512xf32>
    %68 = arith.addf %65, %67 : vector<2x512xf32>
    %69 = vector.extract_strided_slice %68 {offsets = [0, 0], sizes = [2, 384], strides = [1, 1]} : vector<2x512xf32> to vector<2x384xf32>
    %70 = arith.negf %69 : vector<2x384xf32>
    %71 = math.exp %70 : vector<2x384xf32>
    %cst_20 = arith.constant 1.000000e+00 : f32
    %72 = vector.broadcast %cst_20 : f32 to vector<2x384xf32>
    %73 = arith.addf %72, %71 : vector<2x384xf32>
    %74 = arith.divf %72, %73 : vector<2x384xf32>
    %75 = vector.extract_strided_slice %74 {offsets = [0, 0], sizes = [2, 128], strides = [1, 1]} : vector<2x384xf32> to vector<2x128xf32>
    %76 = vector.extract_strided_slice %74 {offsets = [0, 128], sizes = [2, 128], strides = [1, 1]} : vector<2x384xf32> to vector<2x128xf32>
    %77 = vector.extract_strided_slice %74 {offsets = [0, 256], sizes = [2, 128], strides = [1, 1]} : vector<2x384xf32> to vector<2x128xf32>
    %78 = vector.extract_strided_slice %68 {offsets = [0, 384], sizes = [2, 128], strides = [1, 1]} : vector<2x512xf32> to vector<2x128xf32>
    %79 = math.tanh %78 : vector<2x128xf32>
    %80 = arith.mulf %76, %60 : vector<2x128xf32>
    %81 = arith.mulf %75, %79 : vector<2x128xf32>
    %82 = arith.addf %80, %81 : vector<2x128xf32>
    %83 = math.tanh %82 : vector<2x128xf32>
    %84 = arith.mulf %77, %83 : vector<2x128xf32>
    %85 = arith.truncf %84 : vector<2x128xf32> to vector<2x128xbf16>
    %c0_21 = arith.constant 0 : index
    %c0_22 = arith.constant 0 : index
    %86 = vector.load %arg1[%c0_21, %c0_22] : memref<128x512xbf16, #tpu.memory_space<vmem>>, vector<128x512xbf16>
    %cst_23 = arith.constant dense<0.000000e+00> : vector<2x512xf32>
    %87 = tpu.matmul %85, %86, %cst_23 {dimension_numbers = #tpu.dot_dimension_numbers<[1], [0], [0], [1], [0, 0, 1, 1], [], []>} : vector<2x128xbf16>, vector<128x512xbf16>, vector<2x512xf32> -> vector<2x512xf32>
    %c4 = arith.constant 4 : index
    %c0_24 = arith.constant 0 : index
    %c0_25 = arith.constant 0 : index
    %88 = vector.load %arg0[%c4, %c0_24, %c0_25] : memref<9x2x512xf32, #tpu.memory_space<vmem>>, vector<1x2x512xf32>
    %89 = vector.shape_cast %88 : vector<1x2x512xf32> to vector<2x512xf32>
    %90 = arith.addf %87, %89 : vector<2x512xf32>
    %91 = vector.extract_strided_slice %90 {offsets = [0, 0], sizes = [2, 384], strides = [1, 1]} : vector<2x512xf32> to vector<2x384xf32>
    %92 = arith.negf %91 : vector<2x384xf32>
    %93 = math.exp %92 : vector<2x384xf32>
    %cst_26 = arith.constant 1.000000e+00 : f32
    %94 = vector.broadcast %cst_26 : f32 to vector<2x384xf32>
    %95 = arith.addf %94, %93 : vector<2x384xf32>
    %96 = arith.divf %94, %95 : vector<2x384xf32>
    %97 = vector.extract_strided_slice %96 {offsets = [0, 0], sizes = [2, 128], strides = [1, 1]} : vector<2x384xf32> to vector<2x128xf32>
    %98 = vector.extract_strided_slice %96 {offsets = [0, 128], sizes = [2, 128], strides = [1, 1]} : vector<2x384xf32> to vector<2x128xf32>
    %99 = vector.extract_strided_slice %96 {offsets = [0, 256], sizes = [2, 128], strides = [1, 1]} : vector<2x384xf32> to vector<2x128xf32>
    %100 = vector.extract_strided_slice %90 {offsets = [0, 384], sizes = [2, 128], strides = [1, 1]} : vector<2x512xf32> to vector<2x128xf32>
    %101 = math.tanh %100 : vector<2x128xf32>
    %102 = arith.mulf %98, %82 : vector<2x128xf32>
    %103 = arith.mulf %97, %101 : vector<2x128xf32>
    %104 = arith.addf %102, %103 : vector<2x128xf32>
    %105 = math.tanh %104 : vector<2x128xf32>
    %106 = arith.mulf %99, %105 : vector<2x128xf32>
    %107 = arith.truncf %106 : vector<2x128xf32> to vector<2x128xbf16>
    %c0_27 = arith.constant 0 : index
    %c0_28 = arith.constant 0 : index
    %108 = vector.load %arg1[%c0_27, %c0_28] : memref<128x512xbf16, #tpu.memory_space<vmem>>, vector<128x512xbf16>
    %cst_29 = arith.constant dense<0.000000e+00> : vector<2x512xf32>
    %109 = tpu.matmul %107, %108, %cst_29 {dimension_numbers = #tpu.dot_dimension_numbers<[1], [0], [0], [1], [0, 0, 1, 1], [], []>} : vector<2x128xbf16>, vector<128x512xbf16>, vector<2x512xf32> -> vector<2x512xf32>
    %c5 = arith.constant 5 : index
    %c0_30 = arith.constant 0 : index
    %c0_31 = arith.constant 0 : index
    %110 = vector.load %arg0[%c5, %c0_30, %c0_31] : memref<9x2x512xf32, #tpu.memory_space<vmem>>, vector<1x2x512xf32>
    %111 = vector.shape_cast %110 : vector<1x2x512xf32> to vector<2x512xf32>
    %112 = arith.addf %109, %111 : vector<2x512xf32>
    %113 = vector.extract_strided_slice %112 {offsets = [0, 0], sizes = [2, 384], strides = [1, 1]} : vector<2x512xf32> to vector<2x384xf32>
    %114 = arith.negf %113 : vector<2x384xf32>
    %115 = math.exp %114 : vector<2x384xf32>
    %cst_32 = arith.constant 1.000000e+00 : f32
    %116 = vector.broadcast %cst_32 : f32 to vector<2x384xf32>
    %117 = arith.addf %116, %115 : vector<2x384xf32>
    %118 = arith.divf %116, %117 : vector<2x384xf32>
    %119 = vector.extract_strided_slice %118 {offsets = [0, 0], sizes = [2, 128], strides = [1, 1]} : vector<2x384xf32> to vector<2x128xf32>
    %120 = vector.extract_strided_slice %118 {offsets = [0, 128], sizes = [2, 128], strides = [1, 1]} : vector<2x384xf32> to vector<2x128xf32>
    %121 = vector.extract_strided_slice %118 {offsets = [0, 256], sizes = [2, 128], strides = [1, 1]} : vector<2x384xf32> to vector<2x128xf32>
    %122 = vector.extract_strided_slice %112 {offsets = [0, 384], sizes = [2, 128], strides = [1, 1]} : vector<2x512xf32> to vector<2x128xf32>
    %123 = math.tanh %122 : vector<2x128xf32>
    %124 = arith.mulf %120, %104 : vector<2x128xf32>
    %125 = arith.mulf %119, %123 : vector<2x128xf32>
    %126 = arith.addf %124, %125 : vector<2x128xf32>
    %127 = math.tanh %126 : vector<2x128xf32>
    %128 = arith.mulf %121, %127 : vector<2x128xf32>
    %129 = arith.truncf %128 : vector<2x128xf32> to vector<2x128xbf16>
    %c0_33 = arith.constant 0 : index
    %c0_34 = arith.constant 0 : index
    %130 = vector.load %arg1[%c0_33, %c0_34] : memref<128x512xbf16, #tpu.memory_space<vmem>>, vector<128x512xbf16>
    %cst_35 = arith.constant dense<0.000000e+00> : vector<2x512xf32>
    %131 = tpu.matmul %129, %130, %cst_35 {dimension_numbers = #tpu.dot_dimension_numbers<[1], [0], [0], [1], [0, 0, 1, 1], [], []>} : vector<2x128xbf16>, vector<128x512xbf16>, vector<2x512xf32> -> vector<2x512xf32>
    %c6 = arith.constant 6 : index
    %c0_36 = arith.constant 0 : index
    %c0_37 = arith.constant 0 : index
    %132 = vector.load %arg0[%c6, %c0_36, %c0_37] : memref<9x2x512xf32, #tpu.memory_space<vmem>>, vector<1x2x512xf32>
    %133 = vector.shape_cast %132 : vector<1x2x512xf32> to vector<2x512xf32>
    %134 = arith.addf %131, %133 : vector<2x512xf32>
    %135 = vector.extract_strided_slice %134 {offsets = [0, 0], sizes = [2, 384], strides = [1, 1]} : vector<2x512xf32> to vector<2x384xf32>
    %136 = arith.negf %135 : vector<2x384xf32>
    %137 = math.exp %136 : vector<2x384xf32>
    %cst_38 = arith.constant 1.000000e+00 : f32
    %138 = vector.broadcast %cst_38 : f32 to vector<2x384xf32>
    %139 = arith.addf %138, %137 : vector<2x384xf32>
    %140 = arith.divf %138, %139 : vector<2x384xf32>
    %141 = vector.extract_strided_slice %140 {offsets = [0, 0], sizes = [2, 128], strides = [1, 1]} : vector<2x384xf32> to vector<2x128xf32>
    %142 = vector.extract_strided_slice %140 {offsets = [0, 128], sizes = [2, 128], strides = [1, 1]} : vector<2x384xf32> to vector<2x128xf32>
    %143 = vector.extract_strided_slice %140 {offsets = [0, 256], sizes = [2, 128], strides = [1, 1]} : vector<2x384xf32> to vector<2x128xf32>
    %144 = vector.extract_strided_slice %134 {offsets = [0, 384], sizes = [2, 128], strides = [1, 1]} : vector<2x512xf32> to vector<2x128xf32>
    %145 = math.tanh %144 : vector<2x128xf32>
    %146 = arith.mulf %142, %126 : vector<2x128xf32>
    %147 = arith.mulf %141, %145 : vector<2x128xf32>
    %148 = arith.addf %146, %147 : vector<2x128xf32>
    %149 = math.tanh %148 : vector<2x128xf32>
    %150 = arith.mulf %143, %149 : vector<2x128xf32>
    %151 = arith.truncf %150 : vector<2x128xf32> to vector<2x128xbf16>
    %c0_39 = arith.constant 0 : index
    %c0_40 = arith.constant 0 : index
    %152 = vector.load %arg1[%c0_39, %c0_40] : memref<128x512xbf16, #tpu.memory_space<vmem>>, vector<128x512xbf16>
    %cst_41 = arith.constant dense<0.000000e+00> : vector<2x512xf32>
    %153 = tpu.matmul %151, %152, %cst_41 {dimension_numbers = #tpu.dot_dimension_numbers<[1], [0], [0], [1], [0, 0, 1, 1], [], []>} : vector<2x128xbf16>, vector<128x512xbf16>, vector<2x512xf32> -> vector<2x512xf32>
    %c7 = arith.constant 7 : index
    %c0_42 = arith.constant 0 : index
    %c0_43 = arith.constant 0 : index
    %154 = vector.load %arg0[%c7, %c0_42, %c0_43] : memref<9x2x512xf32, #tpu.memory_space<vmem>>, vector<1x2x512xf32>
    %155 = vector.shape_cast %154 : vector<1x2x512xf32> to vector<2x512xf32>
    %156 = arith.addf %153, %155 : vector<2x512xf32>
    %157 = vector.extract_strided_slice %156 {offsets = [0, 0], sizes = [2, 384], strides = [1, 1]} : vector<2x512xf32> to vector<2x384xf32>
    %158 = arith.negf %157 : vector<2x384xf32>
    %159 = math.exp %158 : vector<2x384xf32>
    %cst_44 = arith.constant 1.000000e+00 : f32
    %160 = vector.broadcast %cst_44 : f32 to vector<2x384xf32>
    %161 = arith.addf %160, %159 : vector<2x384xf32>
    %162 = arith.divf %160, %161 : vector<2x384xf32>
    %163 = vector.extract_strided_slice %162 {offsets = [0, 0], sizes = [2, 128], strides = [1, 1]} : vector<2x384xf32> to vector<2x128xf32>
    %164 = vector.extract_strided_slice %162 {offsets = [0, 128], sizes = [2, 128], strides = [1, 1]} : vector<2x384xf32> to vector<2x128xf32>
    %165 = vector.extract_strided_slice %162 {offsets = [0, 256], sizes = [2, 128], strides = [1, 1]} : vector<2x384xf32> to vector<2x128xf32>
    %166 = vector.extract_strided_slice %156 {offsets = [0, 384], sizes = [2, 128], strides = [1, 1]} : vector<2x512xf32> to vector<2x128xf32>
    %167 = math.tanh %166 : vector<2x128xf32>
    %168 = arith.mulf %164, %148 : vector<2x128xf32>
    %169 = arith.mulf %163, %167 : vector<2x128xf32>
    %170 = arith.addf %168, %169 : vector<2x128xf32>
    %171 = math.tanh %170 : vector<2x128xf32>
    %172 = arith.mulf %165, %171 : vector<2x128xf32>
    %173 = arith.truncf %172 : vector<2x128xf32> to vector<2x128xbf16>
    %c0_45 = arith.constant 0 : index
    %c0_46 = arith.constant 0 : index
    %174 = vector.load %arg1[%c0_45, %c0_46] : memref<128x512xbf16, #tpu.memory_space<vmem>>, vector<128x512xbf16>
    %cst_47 = arith.constant dense<0.000000e+00> : vector<2x512xf32>
    %175 = tpu.matmul %173, %174, %cst_47 {dimension_numbers = #tpu.dot_dimension_numbers<[1], [0], [0], [1], [0, 0, 1, 1], [], []>} : vector<2x128xbf16>, vector<128x512xbf16>, vector<2x512xf32> -> vector<2x512xf32>
    %c8 = arith.constant 8 : index
    %c0_48 = arith.constant 0 : index
    %c0_49 = arith.constant 0 : index
    %176 = vector.load %arg0[%c8, %c0_48, %c0_49] : memref<9x2x512xf32, #tpu.memory_space<vmem>>, vector<1x2x512xf32>
    %177 = vector.shape_cast %176 : vector<1x2x512xf32> to vector<2x512xf32>
    %178 = arith.addf %175, %177 : vector<2x512xf32>
    %179 = vector.extract_strided_slice %178 {offsets = [0, 0], sizes = [2, 384], strides = [1, 1]} : vector<2x512xf32> to vector<2x384xf32>
    %180 = arith.negf %179 : vector<2x384xf32>
    %181 = math.exp %180 : vector<2x384xf32>
    %cst_50 = arith.constant 1.000000e+00 : f32
    %182 = vector.broadcast %cst_50 : f32 to vector<2x384xf32>
    %183 = arith.addf %182, %181 : vector<2x384xf32>
    %184 = arith.divf %182, %183 : vector<2x384xf32>
    %185 = vector.extract_strided_slice %184 {offsets = [0, 0], sizes = [2, 128], strides = [1, 1]} : vector<2x384xf32> to vector<2x128xf32>
    %186 = vector.extract_strided_slice %184 {offsets = [0, 128], sizes = [2, 128], strides = [1, 1]} : vector<2x384xf32> to vector<2x128xf32>
    %187 = vector.extract_strided_slice %184 {offsets = [0, 256], sizes = [2, 128], strides = [1, 1]} : vector<2x384xf32> to vector<2x128xf32>
    %188 = vector.extract_strided_slice %178 {offsets = [0, 384], sizes = [2, 128], strides = [1, 1]} : vector<2x512xf32> to vector<2x128xf32>
    %189 = math.tanh %188 : vector<2x128xf32>
    %190 = arith.mulf %186, %170 : vector<2x128xf32>
    %191 = arith.mulf %185, %189 : vector<2x128xf32>
    %192 = arith.addf %190, %191 : vector<2x128xf32>
    %193 = math.tanh %192 : vector<2x128xf32>
    %194 = arith.mulf %187, %193 : vector<2x128xf32>
    %c0_51 = arith.constant 0 : index
    %c0_52 = arith.constant 0 : index
    %195 = vector.load %arg2[%c0_51, %c0_52] : memref<128x1xf32, #tpu.memory_space<vmem>>, vector<128x1xf32>
    %cst_53 = arith.constant dense<0.000000e+00> : vector<2x1xf32>
    %196 = tpu.matmul %194, %195, %cst_53 {dimension_numbers = #tpu.dot_dimension_numbers<[1], [0], [0], [1], [0, 0, 1, 1], [], []>} : vector<2x128xf32>, vector<128x1xf32>, vector<2x1xf32> -> vector<2x1xf32>
    %c0_54 = arith.constant 0 : index
    %c0_55 = arith.constant 0 : index
    %197 = vector.load %arg3[%c0_54, %c0_55] : memref<1x1xf32, #tpu.memory_space<vmem>>, vector<1x1xf32>
    %198 = vector.broadcast %197 : vector<1x1xf32> to vector<2x1xf32>
    %199 = arith.addf %196, %198 : vector<2x1xf32>
    %c0_56 = arith.constant 0 : index
    %c0_57 = arith.constant 0 : index
    %200 = vector.load %arg4[%c0_56, %c0_57] : memref<2x1xf32, #tpu.memory_space<vmem>>, vector<2x1xf32>
    tpu.vector_store %arg4[%c0_56, %c0_57], %199 {strides = array<i32>} : memref<2x1xf32, #tpu.memory_space<vmem>>, vector<2x1xf32>,
    return
  }
}

</mosaic_0001>

<llo_original>
// kernel: tpu_custom_call.1
$region0: #{tpu_custom_call.1}
  #allocation0 [shape = 'u32[]', space=smem, size = 0x4, offset = 0x4, fixed_abs, tag = 'smem constant byte address 0x4 - core index']
  #allocation1 [shape = 'u32[144,128]{1,0:T(1,128)}', space=vmem, size = 0x12000, scoped, tag = 'internal scratch']
  #allocation2 [shape = 'f32[1,1]{1,0:T(1,128)S(1)}', space=vmem, size = 0x200, scoped, tag = 'scoped memory for tpu_custom_call.1']
  %s0 = inlined_call_operand.vmem [shape: f32[9,2,512], index: 0, kind: input, shape index: {}]
  %s1 = inlined_call_operand.hbm [shape: bf16[128,512], index: 1, kind: input, shape index: {}]
  %s2 = inlined_call_operand.vmem [shape: f32[128,1], index: 2, kind: input, shape index: {}]
  %s3 = inlined_call_operand.<no memory space> [shape: f32[1,1], index: 3, kind: input, shape index: {}]
  %s4 = inlined_call_operand.vmem [shape: f32[2,1], index: 4, kind: output, shape index: {}]
  %s5 = sld [smem:[#allocation0]]
  $region30: #{tpu_custom_call.1} parent=0
    _
  %s7 = ssub.s32 1, %s5
  %s8 = scalar_select 0, %s7, %s5
  %v9 = vstv %s3
  %10 = vst [vmem:[#allocation2] sm:$0x1] %v9
  $region1: #{tpu_custom_call.1} parent=0
    #allocation3 [shape = 'u8[131072]{0}', space=vmem, size = 0x20000, scoped, tag = 'input window, operand 1, single buffered']
    #allocation4 [shape = 's32[1]{0}', space=sflag, size = 0x4, scoped, tag = 'scoped memory for tpu_custom_call.1']
    %11 = vsyncpa [#allocation4], 0
    // Predicated region
    $region2: #{tpu_custom_call.1} parent=1 // pred_check
      _
    $region3: #{tpu_custom_call.1} parent=1 // pred_check_branch
      %13 = sbr.rel (0) target = $region5
    $region4: #{tpu_custom_call.1} parent=1 // pred_region
      _
    $region5: #{tpu_custom_call.1} parent=1 // pred_fallthru
      _
    // Predicated region
    $region6: #{tpu_custom_call.1} parent=1 // pred_check
      _
    $region7: #{tpu_custom_call.1} parent=1 // pred_check_branch
      %15 = sbr.rel (0) target = $region9
    $region8: #{tpu_custom_call.1} parent=1 // pred_region
      %s17 = ssub.s32 4096, 4096
      %18 = vsyncadd [#allocation4], %s17
      %s19 = sshll.u32 [#allocation3], 4
      %s20 = int_to_ptr.vmem [resolvable:$true] %s19
      %25 = dma.hbm_to_vmem [thread:$0]  %s1, 4096, %s20, [#allocation4], 256, 256, 16
    $region9: #{tpu_custom_call.1} parent=1 // pred_fallthru
      _
    // Predicated region
    $region10: #{tpu_custom_call.1} parent=1 // pred_check
      _
    $region11: #{tpu_custom_call.1} parent=1 // pred_check_branch
      %27 = sbr.rel (0) target = $region13
    $region12: #{tpu_custom_call.1} parent=1 // pred_region
      _
    $region13: #{tpu_custom_call.1} parent=1 // pred_fallthru
      _
    // Predicated region
    $region14: #{tpu_custom_call.1} parent=1 // pred_check
      _
    $region15: #{tpu_custom_call.1} parent=1 // pred_check_branch
      %29 = sbr.rel (0) target = $region17
    $region16: #{tpu_custom_call.1} parent=1 // pred_region
      _
    $region17: #{tpu_custom_call.1} parent=1 // pred_fallthru
      _
    // Predicated region
    $region18: #{tpu_custom_call.1} parent=1 // pred_check
      _
    $region19: #{tpu_custom_call.1} parent=1 // pred_check_branch
      %31 = sbr.rel (0) target = $region21
    $region20: #{tpu_custom_call.1} parent=1 // pred_region
      %32 = dma.done [#allocation4], 4096
    $region21: #{tpu_custom_call.1} parent=1 // pred_fallthru
      _
    %v34 = vld [vmem:[%s0] sm:$0xff]
    %v35 = vxor.u32 %v34, 2147483648
    %v36 = vmul.f32 %v35, 1.442695
    %v37 = vpow.pop %v36
    %v38 = vadd.f32 %v37, 1.0
    %v39 = vrcp.pop %v38
    %v40 = vmul.f32 1.0, %v39
    %v42 = vrot.slane %v34, 6
    %v44 = vtanh.pop %v42
    %v46 = vrot.slane %v40, 2
    %v48 = vmul.f32 %v46, 0.0
    %v49 = vmul.f32 %v40, %v44
    %v50 = vadd.f32 %v48, %v49
    %v51 = vtanh.pop %v50
    %v52 = vrot.slane %v40, 4
    %v54 = vmul.f32 %v52, %v51
    %v55 = vpack.c.bf16 %v54, %v54
    %v56 = vld [vmem:[#allocation3] sm:$0xff]
    %v57 = vld [vmem:[#allocation3 + $0x8] sm:$0xff]
    %v58 = vld [vmem:[#allocation3 + $0x10] sm:$0xff]
    %v59 = vld [vmem:[#allocation3 + $0x18] sm:$0xff]
    %v60 = vld [vmem:[#allocation3 + $0x20] sm:$0xff]
    %v61 = vld [vmem:[#allocation3 + $0x28] sm:$0xff]
    %v62 = vld [vmem:[#allocation3 + $0x30] sm:$0xff]
    %v63 = vld [vmem:[#allocation3 + $0x38] sm:$0xff]
    %v64 = vld [vmem:[#allocation3 + $0x40] sm:$0xff]
    %v65 = vld [vmem:[#allocation3 + $0x48] sm:$0xff]
    %v66 = vld [vmem:[#allocation3 + $0x50] sm:$0xff]
    %v67 = vld [vmem:[#allocation3 + $0x58] sm:$0xff]
    %v68 = vld [vmem:[#allocation3 + $0x60] sm:$0xff]
    %v69 = vld [vmem:[#allocation3 + $0x68] sm:$0xff]
    %v70 = vld [vmem:[#allocation3 + $0x70] sm:$0xff]
    %v71 = vld [vmem:[#allocation3 + $0x78] sm:$0xff]
    %v72 = vld [vmem:[#allocation3 + $0x80] sm:$0xff]
    %v73 = vld [vmem:[#allocation3 + $0x88] sm:$0xff]
    %v74 = vld [vmem:[#allocation3 + $0x90] sm:$0xff]
    %v75 = vld [vmem:[#allocation3 + $0x98] sm:$0xff]
    %v76 = vld [vmem:[#allocation3 + $0xa0] sm:$0xff]
    %v77 = vld [vmem:[#allocation3 + $0xa8] sm:$0xff]
    %v78 = vld [vmem:[#allocation3 + $0xb0] sm:$0xff]
    %v79 = vld [vmem:[#allocation3 + $0xb8] sm:$0xff]
    %v80 = vld [vmem:[#allocation3 + $0xc0] sm:$0xff]
    %v81 = vld [vmem:[#allocation3 + $0xc8] sm:$0xff]
    %v82 = vld [vmem:[#allocation3 + $0xd0] sm:$0xff]
    %v83 = vld [vmem:[#allocation3 + $0xd8] sm:$0xff]
    %v84 = vld [vmem:[#allocation3 + $0xe0] sm:$0xff]
    %v85 = vld [vmem:[#allocation3 + $0xe8] sm:$0xff]
    %v86 = vld [vmem:[#allocation3 + $0xf0] sm:$0xff]
    %v87 = vld [vmem:[#allocation3 + $0xf8] sm:$0xff]
    %s88 = scalar_lea.vmem %s0, 8
    %v89 = vld [vmem:[%s88] sm:$0xff]
    %v122 = vunpack.c.l.b16 %v56
    %v123 = vunpack.c.h.b16 %v56
    %v124 = vunpack.c.l.b16 %v57
    %v125 = vunpack.c.h.b16 %v57
    %v126 = vunpack.c.l.b16 %v58
    %v127 = vunpack.c.h.b16 %v58
    %v128 = vunpack.c.l.b16 %v59
    %v129 = vunpack.c.h.b16 %v59
    %v130 = vunpack.c.l.b16 %v60
    %v131 = vunpack.c.h.b16 %v60
    %v132 = vunpack.c.l.b16 %v61
    %v133 = vunpack.c.h.b16 %v61
    %v134 = vunpack.c.l.b16 %v62
    %v135 = vunpack.c.h.b16 %v62
    %v136 = vunpack.c.l.b16 %v63
    %v137 = vunpack.c.h.b16 %v63
    %v138 = vunpack.c.l.b16 %v64
    %v139 = vunpack.c.h.b16 %v64
    %v140 = vunpack.c.l.b16 %v65
    %v141 = vunpack.c.h.b16 %v65
    %v142 = vunpack.c.l.b16 %v66
    %v143 = vunpack.c.h.b16 %v66
    %v144 = vunpack.c.l.b16 %v67
    %v145 = vunpack.c.h.b16 %v67
    %v146 = vunpack.c.l.b16 %v68
    %v147 = vunpack.c.h.b16 %v68
    %v148 = vunpack.c.l.b16 %v69
    %v149 = vunpack.c.h.b16 %v69
    %v150 = vunpack.c.l.b16 %v70
    %v151 = vunpack.c.h.b16 %v70
    %v152 = vunpack.c.l.b16 %v71
    %v153 = vunpack.c.h.b16 %v71
    %v154 = vunpack.c.l.b16 %v72
    %v155 = vunpack.c.h.b16 %v72
    %v156 = vunpack.c.l.b16 %v73
    %v157 = vunpack.c.h.b16 %v73
    %v158 = vunpack.c.l.b16 %v74
    %v159 = vunpack.c.h.b16 %v74
    %v160 = vunpack.c.l.b16 %v75
    %v161 = vunpack.c.h.b16 %v75
    %v162 = vunpack.c.l.b16 %v76
    %v163 = vunpack.c.h.b16 %v76
    %v164 = vunpack.c.l.b16 %v77
    %v165 = vunpack.c.h.b16 %v77
    %v166 = vunpack.c.l.b16 %v78
    %v167 = vunpack.c.h.b16 %v78
    %v168 = vunpack.c.l.b16 %v79
    %v169 = vunpack.c.h.b16 %v79
    %v170 = vunpack.c.l.b16 %v80
    %v171 = vunpack.c.h.b16 %v80
    %v172 = vunpack.c.l.b16 %v81
    %v173 = vunpack.c.h.b16 %v81
    %v174 = vunpack.c.l.b16 %v82
    %v175 = vunpack.c.h.b16 %v82
    %v176 = vunpack.c.l.b16 %v83
    %v177 = vunpack.c.h.b16 %v83
    %v178 = vunpack.c.l.b16 %v84
    %v179 = vunpack.c.h.b16 %v84
    %v180 = vunpack.c.l.b16 %v85
    %v181 = vunpack.c.h.b16 %v85
    %v182 = vunpack.c.l.b16 %v86
    %v183 = vunpack.c.h.b16 %v86
    %v184 = vunpack.c.l.b16 %v87
    %v185 = vunpack.c.h.b16 %v87
    %v186 = vpack.c.b16 %v126, %v122
    %v187 = vpack.c.b16 %v127, %v123
    %v188 = vpack.c.b16 %v128, %v124
    %v189 = vpack.c.b16 %v129, %v125
    %v190 = vpack.c.b16 %v134, %v130
    %v191 = vpack.c.b16 %v135, %v131
    %v192 = vpack.c.b16 %v136, %v132
    %v193 = vpack.c.b16 %v137, %v133
    %v194 = vpack.c.b16 %v142, %v138
    %v195 = vpack.c.b16 %v143, %v139
    %v196 = vpack.c.b16 %v144, %v140
    %v197 = vpack.c.b16 %v145, %v141
    %v198 = vpack.c.b16 %v150, %v146
    %v199 = vpack.c.b16 %v151, %v147
    %v200 = vpack.c.b16 %v152, %v148
    %v201 = vpack.c.b16 %v153, %v149
    %v202 = vpack.c.b16 %v158, %v154
    %v203 = vpack.c.b16 %v159, %v155
    %v204 = vpack.c.b16 %v160, %v156
    %v205 = vpack.c.b16 %v161, %v157
    %v206 = vpack.c.b16 %v166, %v162
    %v207 = vpack.c.b16 %v167, %v163
    %v208 = vpack.c.b16 %v168, %v164
    %v209 = vpack.c.b16 %v169, %v165
    %v210 = vpack.c.b16 %v174, %v170
    %v211 = vpack.c.b16 %v175, %v171
    %v212 = vpack.c.b16 %v176, %v172
    %v213 = vpack.c.b16 %v177, %v173
    %v214 = vpack.c.b16 %v182, %v178
    %v215 = vpack.c.b16 %v183, %v179
    %v216 = vpack.c.b16 %v184, %v180
    %v217 = vpack.c.b16 %v185, %v181
    %v251 = vcombine.high %v89, %v89
    %v253 = vunpack.c.l.s4 1983009808
    %v254 = vunpack.c.0.s8 %v253
    %v255 = vlaneseq
    %v256 = vshrl.u32 %v255, 7
    %v257 = vsub.s32 %v254, %v256
    %v258 = vrot.slane %v89, %v257
    %v260 = vunpack.c.l.s4 1983009808
    %v261 = vunpack.c.0.s8 %v260
    %v262 = vlaneseq
    %v263 = vshrl.u32 %v262, 7
    %v264 = vsub.s32 %v261, %v263
    %v265 = vrot.slane %v251, %v264
    %v266 = vcombine.high %v258, %v258
    %v267 = vcombine.high %v265, %v265
    %272 = vmatprep.subr.bf16.mxu0 %v187
    %273 = vmatpush1.bf16.msra.mxu0 %v186
    %274 = vmatprep.subr.bf16.mxu0 %v191
    %275 = vmatpush1.bf16.msra.mxu0 %v190
    %276 = vmatprep.subr.bf16.mxu0 %v195
    %277 = vmatpush1.bf16.msra.mxu0 %v194
    %278 = vmatprep.subr.bf16.mxu0 %v199
    %279 = vmatpush1.bf16.msra.mxu0 %v198
    %280 = vmatprep.subr.bf16.mxu0 %v203
    %281 = vmatpush1.bf16.msra.mxu0 %v202
    %282 = vmatprep.subr.bf16.mxu0 %v207
    %283 = vmatpush1.bf16.msra.mxu0 %v206
    %284 = vmatprep.subr.bf16.mxu0 %v211
    %285 = vmatpush1.bf16.msra.mxu0 %v210
    %286 = vmatprep.subr.bf16.mxu0 %v215
    %287 = vmatpush1.bf16.msra.mxu0 %v214
    %288 = vmatprep.subr.bf16.mxu0 0
    %289 = vmatpush1.bf16.msra.mxu0 0
    %290 = vmatprep.subr.bf16.mxu0 0
    %291 = vmatpush1.bf16.msra.mxu0 0
    %292 = vmatprep.subr.bf16.mxu0 0
    %293 = vmatpush1.bf16.msra.mxu0 0
    %294 = vmatprep.subr.bf16.mxu0 0
    %295 = vmatpush1.bf16.msra.mxu0 0
    %296 = vmatprep.subr.bf16.mxu0 0
    %297 = vmatpush1.bf16.msra.mxu0 0
    %298 = vmatprep.subr.bf16.mxu0 0
    %299 = vmatpush1.bf16.msra.mxu0 0
    %300 = vmatprep.subr.bf16.mxu0 0
    %301 = vmatpush1.bf16.msra.mxu0 0
    %302 = vmatprep.subr.bf16.mxu0 0
    %303 = vmatpush1.bf16.msra.mxu0 0
    %304 = vmatprep.mubr.bf16.mxu0 0
    %305 = vmatmul.mubr.bf16.gmra.mrb[0].mxu0 %v55
    %v306 = vpop.f32.mrb[0].mxu0
    %v307 = vadd.f32 %v258, %v306
    %v308 = vpop.f32.mrb[0].mxu0
    %v309 = vadd.f32 %v266, %v308
    %v310 = vpop.f32.mrb[0].mxu0
    %v311 = vpop.f32.mrb[0].mxu0
    %312 = vdwg.mxu0
    %313 = vmatprep.subr.bf16.mxu0 %v189
    %314 = vmatpush1.bf16.msra.mxu0 %v188
    %315 = vmatprep.subr.bf16.mxu0 %v193
    %316 = vmatpush1.bf16.msra.mxu0 %v192
    %317 = vmatprep.subr.bf16.mxu0 %v197
    %318 = vmatpush1.bf16.msra.mxu0 %v196
    %319 = vmatprep.subr.bf16.mxu0 %v201
    %320 = vmatpush1.bf16.msra.mxu0 %v200
    %321 = vmatprep.subr.bf16.mxu0 %v205
    %322 = vmatpush1.bf16.msra.mxu0 %v204
    %323 = vmatprep.subr.bf16.mxu0 %v209
    %324 = vmatpush1.bf16.msra.mxu0 %v208
    %325 = vmatprep.subr.bf16.mxu0 %v213
    %326 = vmatpush1.bf16.msra.mxu0 %v212
    %327 = vmatprep.subr.bf16.mxu0 %v217
    %328 = vmatpush1.bf16.msra.mxu0 %v216
    %329 = vmatprep.subr.bf16.mxu0 0
    %330 = vmatpush1.bf16.msra.mxu0 0
    %331 = vmatprep.subr.bf16.mxu0 0
    %332 = vmatpush1.bf16.msra.mxu0 0
    %333 = vmatprep.subr.bf16.mxu0 0
    %334 = vmatpush1.bf16.msra.mxu0 0
    %335 = vmatprep.subr.bf16.mxu0 0
    %336 = vmatpush1.bf16.msra.mxu0 0
    %337 = vmatprep.subr.bf16.mxu0 0
    %338 = vmatpush1.bf16.msra.mxu0 0
    %339 = vmatprep.subr.bf16.mxu0 0
    %340 = vmatpush1.bf16.msra.mxu0 0
    %341 = vmatprep.subr.bf16.mxu0 0
    %342 = vmatpush1.bf16.msra.mxu0 0
    %343 = vmatprep.subr.bf16.mxu0 0
    %344 = vmatpush1.bf16.msra.mxu0 0
    %345 = vmatprep.mubr.bf16.mxu0 0
    %346 = vmatmul.mubr.bf16.gmra.mrb[0].mxu0 %v55
    %v347 = vpop.f32.mrb[0].mxu0
    %v348 = vadd.f32 %v265, %v347
    %v349 = vpop.f32.mrb[0].mxu0
    %v350 = vadd.f32 %v267, %v349
    %v351 = vpop.f32.mrb[0].mxu0
    %v352 = vpop.f32.mrb[0].mxu0
    %353 = vdwg.mxu0
    %v354 = vxor.u32 %v307, 2147483648
    %v355 = vxor.u32 %v309, 2147483648
    %v356 = vxor.u32 %v348, 2147483648
    %v357 = vmul.f32 %v354, 1.442695
    %v358 = vpow.pop %v357
    %v359 = vmul.f32 %v355, 1.442695
    %v360 = vpow.pop %v359
    %v361 = vmul.f32 %v356, 1.442695
    %v362 = vpow.pop %v361
    %v363 = vadd.f32 %v358, 1.0
    %v364 = vadd.f32 %v360, 1.0
    %v365 = vadd.f32 %v362, 1.0
    %v366 = vrcp.pop %v363
    %v367 = vmul.f32 1.0, %v366
    %v368 = vrcp.pop %v364
    %v369 = vmul.f32 1.0, %v368
    %v370 = vrcp.pop %v365
    %v371 = vmul.f32 1.0, %v370
    %v372 = vtanh.pop %v350
    %v373 = vmul.f32 %v369, %v50
    %v374 = vmul.f32 %v367, %v372
    %v375 = vadd.f32 %v373, %v374
    %v376 = vtanh.pop %v375
    %v377 = vmul.f32 %v371, %v376
    %v378 = vpack.c.bf16 %v377, %v377
    %s379 = scalar_lea.vmem %s0, 16
    %v380 = vld [vmem:[%s379] sm:$0xff]
    %v382 = vcombine.high %v380, %v380
    %v384 = vunpack.c.l.s4 1983009808
    %v385 = vunpack.c.0.s8 %v384
    %v386 = vlaneseq
    %v387 = vshrl.u32 %v386, 7
    %v388 = vsub.s32 %v385, %v387
    %v389 = vrot.slane %v380, %v388
    %v391 = vunpack.c.l.s4 1983009808
    %v392 = vunpack.c.0.s8 %v391
    %v393 = vlaneseq
    %v394 = vshrl.u32 %v393, 7
    %v395 = vsub.s32 %v392, %v394
    %v396 = vrot.slane %v382, %v395
    %v397 = vcombine.high %v389, %v389
    %v398 = vcombine.high %v396, %v396
    %403 = vmatprep.subr.bf16.mxu0 %v187
    %404 = vmatpush1.bf16.msra.mxu0 %v186
    %405 = vmatprep.subr.bf16.mxu0 %v191
    %406 = vmatpush1.bf16.msra.mxu0 %v190
    %407 = vmatprep.subr.bf16.mxu0 %v195
    %408 = vmatpush1.bf16.msra.mxu0 %v194
    %409 = vmatprep.subr.bf16.mxu0 %v199
    %410 = vmatpush1.bf16.msra.mxu0 %v198
    %411 = vmatprep.subr.bf16.mxu0 %v203
    %412 = vmatpush1.bf16.msra.mxu0 %v202
    %413 = vmatprep.subr.bf16.mxu0 %v207
    %414 = vmatpush1.bf16.msra.mxu0 %v206
    %415 = vmatprep.subr.bf16.mxu0 %v211
    %416 = vmatpush1.bf16.msra.mxu0 %v210
    %417 = vmatprep.subr.bf16.mxu0 %v215
    %418 = vmatpush1.bf16.msra.mxu0 %v214
    %419 = vmatprep.subr.bf16.mxu0 0
    %420 = vmatpush1.bf16.msra.mxu0 0
    %421 = vmatprep.subr.bf16.mxu0 0
    %422 = vmatpush1.bf16.msra.mxu0 0
    %423 = vmatprep.subr.bf16.mxu0 0
    %424 = vmatpush1.bf16.msra.mxu0 0
    %425 = vmatprep.subr.bf16.mxu0 0
    %426 = vmatpush1.bf16.msra.mxu0 0
    %427 = vmatprep.subr.bf16.mxu0 0
    %428 = vmatpush1.bf16.msra.mxu0 0
    %429 = vmatprep.subr.bf16.mxu0 0
    %430 = vmatpush1.bf16.msra.mxu0 0
    %431 = vmatprep.subr.bf16.mxu0 0
    %432 = vmatpush1.bf16.msra.mxu0 0
    %433 = vmatprep.subr.bf16.mxu0 0
    %434 = vmatpush1.bf16.msra.mxu0 0
    %435 = vmatprep.mubr.bf16.mxu0 0
    %436 = vmatmul.mubr.bf16.gmra.mrb[0].mxu0 %v378
    %v437 = vpop.f32.mrb[0].mxu0
    %v438 = vadd.f32 %v389, %v437
    %v439 = vpop.f32.mrb[0].mxu0
    %v440 = vadd.f32 %v397, %v439
    %v441 = vpop.f32.mrb[0].mxu0
    %v442 = vpop.f32.mrb[0].mxu0
    %443 = vdwg.mxu0
    %444 = vmatprep.subr.bf16.mxu0 %v189
    %445 = vmatpush1.bf16.msra.mxu0 %v188
    %446 = vmatprep.subr.bf16.mxu0 %v193
    %447 = vmatpush1.bf16.msra.mxu0 %v192
    %448 = vmatprep.subr.bf16.mxu0 %v197
    %449 = vmatpush1.bf16.msra.mxu0 %v196
    %450 = vmatprep.subr.bf16.mxu0 %v201
    %451 = vmatpush1.bf16.msra.mxu0 %v200
    %452 = vmatprep.subr.bf16.mxu0 %v205
    %453 = vmatpush1.bf16.msra.mxu0 %v204
    %454 = vmatprep.subr.bf16.mxu0 %v209
    %455 = vmatpush1.bf16.msra.mxu0 %v208
    %456 = vmatprep.subr.bf16.mxu0 %v213
    %457 = vmatpush1.bf16.msra.mxu0 %v212
    %458 = vmatprep.subr.bf16.mxu0 %v217
    %459 = vmatpush1.bf16.msra.mxu0 %v216
    %460 = vmatprep.subr.bf16.mxu0 0
    %461 = vmatpush1.bf16.msra.mxu0 0
    %462 = vmatprep.subr.bf16.mxu0 0
    %463 = vmatpush1.bf16.msra.mxu0 0
    %464 = vmatprep.subr.bf16.mxu0 0
    %465 = vmatpush1.bf16.msra.mxu0 0
    %466 = vmatprep.subr.bf16.mxu0 0
    %467 = vmatpush1.bf16.msra.mxu0 0
    %468 = vmatprep.subr.bf16.mxu0 0
    %469 = vmatpush1.bf16.msra.mxu0 0
    %470 = vmatprep.subr.bf16.mxu0 0
    %471 = vmatpush1.bf16.msra.mxu0 0
    %472 = vmatprep.subr.bf16.mxu0 0
    %473 = vmatpush1.bf16.msra.mxu0 0
    %474 = vmatprep.subr.bf16.mxu0 0
    %475 = vmatpush1.bf16.msra.mxu0 0
    %476 = vmatprep.mubr.bf16.mxu0 0
    %477 = vmatmul.mubr.bf16.gmra.mrb[0].mxu0 %v378
    %v478 = vpop.f32.mrb[0].mxu0
    %v479 = vadd.f32 %v396, %v478
    %v480 = vpop.f32.mrb[0].mxu0
    %v481 = vadd.f32 %v398, %v480
    %v482 = vpop.f32.mrb[0].mxu0
    %v483 = vpop.f32.mrb[0].mxu0
    %484 = vdwg.mxu0
    %v485 = vxor.u32 %v438, 2147483648
    %v486 = vxor.u32 %v440, 2147483648
    %v487 = vxor.u32 %v479, 2147483648
    %v488 = vmul.f32 %v485, 1.442695
    %v489 = vpow.pop %v488
    %v490 = vmul.f32 %v486, 1.442695
    %v491 = vpow.pop %v490
    %v492 = vmul.f32 %v487, 1.442695
    %v493 = vpow.pop %v492
    %v494 = vadd.f32 %v489, 1.0
    %v495 = vadd.f32 %v491, 1.0
    %v496 = vadd.f32 %v493, 1.0
    %v497 = vrcp.pop %v494
    %v498 = vmul.f32 1.0, %v497
    %v499 = vrcp.pop %v495
    %v500 = vmul.f32 1.0, %v499
    %v501 = vrcp.pop %v496
    %v502 = vmul.f32 1.0, %v501
    %v503 = vtanh.pop %v481
    %v504 = vmul.f32 %v500, %v375
    %v505 = vmul.f32 %v498, %v503
    %v506 = vadd.f32 %v504, %v505
    %v507 = vtanh.pop %v506
    %v508 = vmul.f32 %v502, %v507
    %v509 = vpack.c.bf16 %v508, %v508
    %s510 = scalar_lea.vmem %s0, 24
    %v511 = vld [vmem:[%s510] sm:$0xff]
    %v513 = vcombine.high %v511, %v511
    %v515 = vunpack.c.l.s4 1983009808
    %v516 = vunpack.c.0.s8 %v515
    %v517 = vlaneseq
    %v518 = vshrl.u32 %v517, 7
    %v519 = vsub.s32 %v516, %v518
    %v520 = vrot.slane %v511, %v519
    %v522 = vunpack.c.l.s4 1983009808
    %v523 = vunpack.c.0.s8 %v522
    %v524 = vlaneseq
    %v525 = vshrl.u32 %v524, 7
    %v526 = vsub.s32 %v523, %v525
    %v527 = vrot.slane %v513, %v526
    %v528 = vcombine.high %v520, %v520
    %v529 = vcombine.high %v527, %v527
    %534 = vmatprep.subr.bf16.mxu0 %v187
    %535 = vmatpush1.bf16.msra.mxu0 %v186
    %536 = vmatprep.subr.bf16.mxu0 %v191
    %537 = vmatpush1.bf16.msra.mxu0 %v190
    %538 = vmatprep.subr.bf16.mxu0 %v195
    %539 = vmatpush1.bf16.msra.mxu0 %v194
    %540 = vmatprep.subr.bf16.mxu0 %v199
    %541 = vmatpush1.bf16.msra.mxu0 %v198
    %542 = vmatprep.subr.bf16.mxu0 %v203
    %543 = vmatpush1.bf16.msra.mxu0 %v202
    %544 = vmatprep.subr.bf16.mxu0 %v207
    %545 = vmatpush1.bf16.msra.mxu0 %v206
    %546 = vmatprep.subr.bf16.mxu0 %v211
    %547 = vmatpush1.bf16.msra.mxu0 %v210
    %548 = vmatprep.subr.bf16.mxu0 %v215
    %549 = vmatpush1.bf16.msra.mxu0 %v214
    %550 = vmatprep.subr.bf16.mxu0 0
    %551 = vmatpush1.bf16.msra.mxu0 0
    %552 = vmatprep.subr.bf16.mxu0 0
    %553 = vmatpush1.bf16.msra.mxu0 0
    %554 = vmatprep.subr.bf16.mxu0 0
    %555 = vmatpush1.bf16.msra.mxu0 0
    %556 = vmatprep.subr.bf16.mxu0 0
    %557 = vmatpush1.bf16.msra.mxu0 0
    %558 = vmatprep.subr.bf16.mxu0 0
    %559 = vmatpush1.bf16.msra.mxu0 0
    %560 = vmatprep.subr.bf16.mxu0 0
    %561 = vmatpush1.bf16.msra.mxu0 0
    %562 = vmatprep.subr.bf16.mxu0 0
    %563 = vmatpush1.bf16.msra.mxu0 0
    %564 = vmatprep.subr.bf16.mxu0 0
    %565 = vmatpush1.bf16.msra.mxu0 0
    %566 = vmatprep.mubr.bf16.mxu0 0
    %567 = vmatmul.mubr.bf16.gmra.mrb[0].mxu0 %v509
    %v568 = vpop.f32.mrb[0].mxu0
    %v569 = vadd.f32 %v520, %v568
    %v570 = vpop.f32.mrb[0].mxu0
    %v571 = vadd.f32 %v528, %v570
    %v572 = vpop.f32.mrb[0].mxu0
    %v573 = vpop.f32.mrb[0].mxu0
    %574 = vdwg.mxu0
    %575 = vmatprep.subr.bf16.mxu0 %v189
    %576 = vmatpush1.bf16.msra.mxu0 %v188
    %577 = vmatprep.subr.bf16.mxu0 %v193
    %578 = vmatpush1.bf16.msra.mxu0 %v192
    %579 = vmatprep.subr.bf16.mxu0 %v197
    %580 = vmatpush1.bf16.msra.mxu0 %v196
    %581 = vmatprep.subr.bf16.mxu0 %v201
    %582 = vmatpush1.bf16.msra.mxu0 %v200
    %583 = vmatprep.subr.bf16.mxu0 %v205
    %584 = vmatpush1.bf16.msra.mxu0 %v204
    %585 = vmatprep.subr.bf16.mxu0 %v209
    %586 = vmatpush1.bf16.msra.mxu0 %v208
    %587 = vmatprep.subr.bf16.mxu0 %v213
    %588 = vmatpush1.bf16.msra.mxu0 %v212
    %589 = vmatprep.subr.bf16.mxu0 %v217
    %590 = vmatpush1.bf16.msra.mxu0 %v216
    %591 = vmatprep.subr.bf16.mxu0 0
    %592 = vmatpush1.bf16.msra.mxu0 0
    %593 = vmatprep.subr.bf16.mxu0 0
    %594 = vmatpush1.bf16.msra.mxu0 0
    %595 = vmatprep.subr.bf16.mxu0 0
    %596 = vmatpush1.bf16.msra.mxu0 0
    %597 = vmatprep.subr.bf16.mxu0 0
    %598 = vmatpush1.bf16.msra.mxu0 0
    %599 = vmatprep.subr.bf16.mxu0 0
    %600 = vmatpush1.bf16.msra.mxu0 0
    %601 = vmatprep.subr.bf16.mxu0 0
    %602 = vmatpush1.bf16.msra.mxu0 0
    %603 = vmatprep.subr.bf16.mxu0 0
    %604 = vmatpush1.bf16.msra.mxu0 0
    %605 = vmatprep.subr.bf16.mxu0 0
    %606 = vmatpush1.bf16.msra.mxu0 0
    %607 = vmatprep.mubr.bf16.mxu0 0
    %608 = vmatmul.mubr.bf16.gmra.mrb[0].mxu0 %v509
    %v609 = vpop.f32.mrb[0].mxu0
    %v610 = vadd.f32 %v527, %v609
    %v611 = vpop.f32.mrb[0].mxu0
    %v612 = vadd.f32 %v529, %v611
    %v613 = vpop.f32.mrb[0].mxu0
    %v614 = vpop.f32.mrb[0].mxu0
    %615 = vdwg.mxu0
    %v616 = vxor.u32 %v569, 2147483648
    %v617 = vxor.u32 %v571, 2147483648
    %v618 = vxor.u32 %v610, 2147483648
    %v619 = vmul.f32 %v616, 1.442695
    %v620 = vpow.pop %v619
    %v621 = vmul.f32 %v617, 1.442695
    %v622 = vpow.pop %v621
    %v623 = vmul.f32 %v618, 1.442695
    %v624 = vpow.pop %v623
    %v625 = vadd.f32 %v620, 1.0
    %v626 = vadd.f32 %v622, 1.0
    %v627 = vadd.f32 %v624, 1.0
    %v628 = vrcp.pop %v625
    %v629 = vmul.f32 1.0, %v628
    %v630 = vrcp.pop %v626
    %v631 = vmul.f32 1.0, %v630
    %v632 = vrcp.pop %v627
    %v633 = vmul.f32 1.0, %v632
    %v634 = vtanh.pop %v612
    %v635 = vmul.f32 %v631, %v506
    %v636 = vmul.f32 %v629, %v634
    %v637 = vadd.f32 %v635, %v636
    %v638 = vtanh.pop %v637
    %v639 = vmul.f32 %v633, %v638
    %v640 = vpack.c.bf16 %v639, %v639
    %s641 = scalar_lea.vmem %s0, 32
    %v642 = vld [vmem:[%s641] sm:$0xff]
    %v644 = vcombine.high %v642, %v642
    %v646 = vunpack.c.l.s4 1983009808
    %v647 = vunpack.c.0.s8 %v646
    %v648 = vlaneseq
    %v649 = vshrl.u32 %v648, 7
    %v650 = vsub.s32 %v647, %v649
    %v651 = vrot.slane %v642, %v650
    %v653 = vunpack.c.l.s4 1983009808
    %v654 = vunpack.c.0.s8 %v653
    %v655 = vlaneseq
    %v656 = vshrl.u32 %v655, 7
    %v657 = vsub.s32 %v654, %v656
    %v658 = vrot.slane %v644, %v657
    %v659 = vcombine.high %v651, %v651
    %v660 = vcombine.high %v658, %v658
    %665 = vmatprep.subr.bf16.mxu0 %v187
    %666 = vmatpush1.bf16.msra.mxu0 %v186
    %667 = vmatprep.subr.bf16.mxu0 %v191
    %668 = vmatpush1.bf16.msra.mxu0 %v190
    %669 = vmatprep.subr.bf16.mxu0 %v195
    %670 = vmatpush1.bf16.msra.mxu0 %v194
    %671 = vmatprep.subr.bf16.mxu0 %v199
    %672 = vmatpush1.bf16.msra.mxu0 %v198
    %673 = vmatprep.subr.bf16.mxu0 %v203
    %674 = vmatpush1.bf16.msra.mxu0 %v202
    %675 = vmatprep.subr.bf16.mxu0 %v207
    %676 = vmatpush1.bf16.msra.mxu0 %v206
    %677 = vmatprep.subr.bf16.mxu0 %v211
    %678 = vmatpush1.bf16.msra.mxu0 %v210
    %679 = vmatprep.subr.bf16.mxu0 %v215
    %680 = vmatpush1.bf16.msra.mxu0 %v214
    %681 = vmatprep.subr.bf16.mxu0 0
    %682 = vmatpush1.bf16.msra.mxu0 0
    %683 = vmatprep.subr.bf16.mxu0 0
    %684 = vmatpush1.bf16.msra.mxu0 0
    %685 = vmatprep.subr.bf16.mxu0 0
    %686 = vmatpush1.bf16.msra.mxu0 0
    %687 = vmatprep.subr.bf16.mxu0 0
    %688 = vmatpush1.bf16.msra.mxu0 0
    %689 = vmatprep.subr.bf16.mxu0 0
    %690 = vmatpush1.bf16.msra.mxu0 0
    %691 = vmatprep.subr.bf16.mxu0 0
    %692 = vmatpush1.bf16.msra.mxu0 0
    %693 = vmatprep.subr.bf16.mxu0 0
    %694 = vmatpush1.bf16.msra.mxu0 0
    %695 = vmatprep.subr.bf16.mxu0 0
    %696 = vmatpush1.bf16.msra.mxu0 0
    %697 = vmatprep.mubr.bf16.mxu0 0
    %698 = vmatmul.mubr.bf16.gmra.mrb[0].mxu0 %v640
    %v699 = vpop.f32.mrb[0].mxu0
    %v700 = vadd.f32 %v651, %v699
    %v701 = vpop.f32.mrb[0].mxu0
    %v702 = vadd.f32 %v659, %v701
    %v703 = vpop.f32.mrb[0].mxu0
    %v704 = vpop.f32.mrb[0].mxu0
    %705 = vdwg.mxu0
    %706 = vmatprep.subr.bf16.mxu0 %v189
    %707 = vmatpush1.bf16.msra.mxu0 %v188
    %708 = vmatprep.subr.bf16.mxu0 %v193
    %709 = vmatpush1.bf16.msra.mxu0 %v192
    %710 = vmatprep.subr.bf16.mxu0 %v197
    %711 = vmatpush1.bf16.msra.mxu0 %v196
    %712 = vmatprep.subr.bf16.mxu0 %v201
    %713 = vmatpush1.bf16.msra.mxu0 %v200
    %714 = vmatprep.subr.bf16.mxu0 %v205
    %715 = vmatpush1.bf16.msra.mxu0 %v204
    %716 = vmatprep.subr.bf16.mxu0 %v209
    %717 = vmatpush1.bf16.msra.mxu0 %v208
    %718 = vmatprep.subr.bf16.mxu0 %v213
    %719 = vmatpush1.bf16.msra.mxu0 %v212
    %720 = vmatprep.subr.bf16.mxu0 %v217
    %721 = vmatpush1.bf16.msra.mxu0 %v216
    %722 = vmatprep.subr.bf16.mxu0 0
    %723 = vmatpush1.bf16.msra.mxu0 0
    %724 = vmatprep.subr.bf16.mxu0 0
    %725 = vmatpush1.bf16.msra.mxu0 0
    %726 = vmatprep.subr.bf16.mxu0 0
    %727 = vmatpush1.bf16.msra.mxu0 0
    %728 = vmatprep.subr.bf16.mxu0 0
    %729 = vmatpush1.bf16.msra.mxu0 0
    %730 = vmatprep.subr.bf16.mxu0 0
    %731 = vmatpush1.bf16.msra.mxu0 0
    %732 = vmatprep.subr.bf16.mxu0 0
    %733 = vmatpush1.bf16.msra.mxu0 0
    %734 = vmatprep.subr.bf16.mxu0 0
    %735 = vmatpush1.bf16.msra.mxu0 0
    %736 = vmatprep.subr.bf16.mxu0 0
    %737 = vmatpush1.bf16.msra.mxu0 0
    %738 = vmatprep.mubr.bf16.mxu0 0
    %739 = vmatmul.mubr.bf16.gmra.mrb[0].mxu0 %v640
    %v740 = vpop.f32.mrb[0].mxu0
    %v741 = vadd.f32 %v658, %v740
    %v742 = vpop.f32.mrb[0].mxu0
    %v743 = vadd.f32 %v660, %v742
    %v744 = vpop.f32.mrb[0].mxu0
    %v745 = vpop.f32.mrb[0].mxu0
    %746 = vdwg.mxu0
    %v747 = vxor.u32 %v700, 2147483648
    %v748 = vxor.u32 %v702, 2147483648
    %v749 = vxor.u32 %v741, 2147483648
    %v750 = vmul.f32 %v747, 1.442695
    %v751 = vpow.pop %v750
    %v752 = vmul.f32 %v748, 1.442695
    %v753 = vpow.pop %v752
    %v754 = vmul.f32 %v749, 1.442695
    %v755 = vpow.pop %v754
    %v756 = vadd.f32 %v751, 1.0
    %v757 = vadd.f32 %v753, 1.0
    %v758 = vadd.f32 %v755, 1.0
    %v759 = vrcp.pop %v756
    %v760 = vmul.f32 1.0, %v759
    %v761 = vrcp.pop %v757
    %v762 = vmul.f32 1.0, %v761
    %v763 = vrcp.pop %v758
    %v764 = vmul.f32 1.0, %v763
    %v765 = vtanh.pop %v743
    %v766 = vmul.f32 %v762, %v637
    %v767 = vmul.f32 %v760, %v765
    %v768 = vadd.f32 %v766, %v767
    %v769 = vtanh.pop %v768
    %v770 = vmul.f32 %v764, %v769
    %v771 = vpack.c.bf16 %v770, %v770
    %s772 = scalar_lea.vmem %s0, 40
    %v773 = vld [vmem:[%s772] sm:$0xff]
    %v775 = vcombine.high %v773, %v773
    %v777 = vunpack.c.l.s4 1983009808
    %v778 = vunpack.c.0.s8 %v777
    %v779 = vlaneseq
    %v780 = vshrl.u32 %v779, 7
    %v781 = vsub.s32 %v778, %v780
    %v782 = vrot.slane %v773, %v781
    %v784 = vunpack.c.l.s4 1983009808
    %v785 = vunpack.c.0.s8 %v784
    %v786 = vlaneseq
    %v787 = vshrl.u32 %v786, 7
    %v788 = vsub.s32 %v785, %v787
    %v789 = vrot.slane %v775, %v788
    %v790 = vcombine.high %v782, %v782
    %v791 = vcombine.high %v789, %v789
    %796 = vmatprep.subr.bf16.mxu0 %v187
    %797 = vmatpush1.bf16.msra.mxu0 %v186
    %798 = vmatprep.subr.bf16.mxu0 %v191
    %799 = vmatpush1.bf16.msra.mxu0 %v190
    %800 = vmatprep.subr.bf16.mxu0 %v195
    %801 = vmatpush1.bf16.msra.mxu0 %v194
    %802 = vmatprep.subr.bf16.mxu0 %v199
    %803 = vmatpush1.bf16.msra.mxu0 %v198
    %804 = vmatprep.subr.bf16.mxu0 %v203
    %805 = vmatpush1.bf16.msra.mxu0 %v202
    %806 = vmatprep.subr.bf16.mxu0 %v207
    %807 = vmatpush1.bf16.msra.mxu0 %v206
    %808 = vmatprep.subr.bf16.mxu0 %v211
    %809 = vmatpush1.bf16.msra.mxu0 %v210
    %810 = vmatprep.subr.bf16.mxu0 %v215
    %811 = vmatpush1.bf16.msra.mxu0 %v214
    %812 = vmatprep.subr.bf16.mxu0 0
    %813 = vmatpush1.bf16.msra.mxu0 0
    %814 = vmatprep.subr.bf16.mxu0 0
    %815 = vmatpush1.bf16.msra.mxu0 0
    %816 = vmatprep.subr.bf16.mxu0 0
    %817 = vmatpush1.bf16.msra.mxu0 0
    %818 = vmatprep.subr.bf16.mxu0 0
    %819 = vmatpush1.bf16.msra.mxu0 0
    %820 = vmatprep.subr.bf16.mxu0 0
    %821 = vmatpush1.bf16.msra.mxu0 0
    %822 = vmatprep.subr.bf16.mxu0 0
    %823 = vmatpush1.bf16.msra.mxu0 0
    %824 = vmatprep.subr.bf16.mxu0 0
    %825 = vmatpush1.bf16.msra.mxu0 0
    %826 = vmatprep.subr.bf16.mxu0 0
    %827 = vmatpush1.bf16.msra.mxu0 0
    %828 = vmatprep.mubr.bf16.mxu0 0
    %829 = vmatmul.mubr.bf16.gmra.mrb[0].mxu0 %v771
    %v830 = vpop.f32.mrb[0].mxu0
    %v831 = vadd.f32 %v782, %v830
    %v832 = vpop.f32.mrb[0].mxu0
    %v833 = vadd.f32 %v790, %v832
    %v834 = vpop.f32.mrb[0].mxu0
    %v835 = vpop.f32.mrb[0].mxu0
    %836 = vdwg.mxu0
    %837 = vmatprep.subr.bf16.mxu0 %v189
    %838 = vmatpush1.bf16.msra.mxu0 %v188
    %839 = vmatprep.subr.bf16.mxu0 %v193
    %840 = vmatpush1.bf16.msra.mxu0 %v192
    %841 = vmatprep.subr.bf16.mxu0 %v197
    %842 = vmatpush1.bf16.msra.mxu0 %v196
    %843 = vmatprep.subr.bf16.mxu0 %v201
    %844 = vmatpush1.bf16.msra.mxu0 %v200
    %845 = vmatprep.subr.bf16.mxu0 %v205
    %846 = vmatpush1.bf16.msra.mxu0 %v204
    %847 = vmatprep.subr.bf16.mxu0 %v209
    %848 = vmatpush1.bf16.msra.mxu0 %v208
    %849 = vmatprep.subr.bf16.mxu0 %v213
    %850 = vmatpush1.bf16.msra.mxu0 %v212
    %851 = vmatprep.subr.bf16.mxu0 %v217
    %852 = vmatpush1.bf16.msra.mxu0 %v216
    %853 = vmatprep.subr.bf16.mxu0 0
    %854 = vmatpush1.bf16.msra.mxu0 0
    %855 = vmatprep.subr.bf16.mxu0 0
    %856 = vmatpush1.bf16.msra.mxu0 0
    %857 = vmatprep.subr.bf16.mxu0 0
    %858 = vmatpush1.bf16.msra.mxu0 0
    %859 = vmatprep.subr.bf16.mxu0 0
    %860 = vmatpush1.bf16.msra.mxu0 0
    %861 = vmatprep.subr.bf16.mxu0 0
    %862 = vmatpush1.bf16.msra.mxu0 0
    %863 = vmatprep.subr.bf16.mxu0 0
    %864 = vmatpush1.bf16.msra.mxu0 0
    %865 = vmatprep.subr.bf16.mxu0 0
    %866 = vmatpush1.bf16.msra.mxu0 0
    %867 = vmatprep.subr.bf16.mxu0 0
    %868 = vmatpush1.bf16.msra.mxu0 0
    %869 = vmatprep.mubr.bf16.mxu0 0
    %870 = vmatmul.mubr.bf16.gmra.mrb[0].mxu0 %v771
    %v871 = vpop.f32.mrb[0].mxu0
    %v872 = vadd.f32 %v789, %v871
    %v873 = vpop.f32.mrb[0].mxu0
    %v874 = vadd.f32 %v791, %v873
    %v875 = vpop.f32.mrb[0].mxu0
    %v876 = vpop.f32.mrb[0].mxu0
    %877 = vdwg.mxu0
    %v878 = vxor.u32 %v831, 2147483648
    %v879 = vxor.u32 %v833, 2147483648
    %v880 = vxor.u32 %v872, 2147483648
    %v881 = vmul.f32 %v878, 1.442695
    %v882 = vpow.pop %v881
    %v883 = vmul.f32 %v879, 1.442695
    %v884 = vpow.pop %v883
    %v885 = vmul.f32 %v880, 1.442695
    %v886 = vpow.pop %v885
    %v887 = vadd.f32 %v882, 1.0
    %v888 = vadd.f32 %v884, 1.0
    %v889 = vadd.f32 %v886, 1.0
    %v890 = vrcp.pop %v887
    %v891 = vmul.f32 1.0, %v890
    %v892 = vrcp.pop %v888
    %v893 = vmul.f32 1.0, %v892
    %v894 = vrcp.pop %v889
    %v895 = vmul.f32 1.0, %v894
    %v896 = vtanh.pop %v874
    %v897 = vmul.f32 %v893, %v768
    %v898 = vmul.f32 %v891, %v896
    %v899 = vadd.f32 %v897, %v898
    %v900 = vtanh.pop %v899
    %v901 = vmul.f32 %v895, %v900
    %v902 = vpack.c.bf16 %v901, %v901
    %s903 = scalar_lea.vmem %s0, 48
    %v904 = vld [vmem:[%s903] sm:$0xff]
    %v906 = vcombine.high %v904, %v904
    %v908 = vunpack.c.l.s4 1983009808
    %v909 = vunpack.c.0.s8 %v908
    %v910 = vlaneseq
    %v911 = vshrl.u32 %v910, 7
    %v912 = vsub.s32 %v909, %v911
    %v913 = vrot.slane %v904, %v912
    %v915 = vunpack.c.l.s4 1983009808
    %v916 = vunpack.c.0.s8 %v915
    %v917 = vlaneseq
    %v918 = vshrl.u32 %v917, 7
    %v919 = vsub.s32 %v916, %v918
    %v920 = vrot.slane %v906, %v919
    %v921 = vcombine.high %v913, %v913
    %v922 = vcombine.high %v920, %v920
    %927 = vmatprep.subr.bf16.mxu0 %v187
    %928 = vmatpush1.bf16.msra.mxu0 %v186
    %929 = vmatprep.subr.bf16.mxu0 %v191
    %930 = vmatpush1.bf16.msra.mxu0 %v190
    %931 = vmatprep.subr.bf16.mxu0 %v195
    %932 = vmatpush1.bf16.msra.mxu0 %v194
    %933 = vmatprep.subr.bf16.mxu0 %v199
    %934 = vmatpush1.bf16.msra.mxu0 %v198
    %935 = vmatprep.subr.bf16.mxu0 %v203
    %936 = vmatpush1.bf16.msra.mxu0 %v202
    %937 = vmatprep.subr.bf16.mxu0 %v207
    %938 = vmatpush1.bf16.msra.mxu0 %v206
    %939 = vmatprep.subr.bf16.mxu0 %v211
    %940 = vmatpush1.bf16.msra.mxu0 %v210
    %941 = vmatprep.subr.bf16.mxu0 %v215
    %942 = vmatpush1.bf16.msra.mxu0 %v214
    %943 = vmatprep.subr.bf16.mxu0 0
    %944 = vmatpush1.bf16.msra.mxu0 0
    %945 = vmatprep.subr.bf16.mxu0 0
    %946 = vmatpush1.bf16.msra.mxu0 0
    %947 = vmatprep.subr.bf16.mxu0 0
    %948 = vmatpush1.bf16.msra.mxu0 0
    %949 = vmatprep.subr.bf16.mxu0 0
    %950 = vmatpush1.bf16.msra.mxu0 0
    %951 = vmatprep.subr.bf16.mxu0 0
    %952 = vmatpush1.bf16.msra.mxu0 0
    %953 = vmatprep.subr.bf16.mxu0 0
    %954 = vmatpush1.bf16.msra.mxu0 0
    %955 = vmatprep.subr.bf16.mxu0 0
    %956 = vmatpush1.bf16.msra.mxu0 0
    %957 = vmatprep.subr.bf16.mxu0 0
    %958 = vmatpush1.bf16.msra.mxu0 0
    %959 = vmatprep.mubr.bf16.mxu0 0
    %960 = vmatmul.mubr.bf16.gmra.mrb[0].mxu0 %v902
    %v961 = vpop.f32.mrb[0].mxu0
    %v962 = vadd.f32 %v913, %v961
    %v963 = vpop.f32.mrb[0].mxu0
    %v964 = vadd.f32 %v921, %v963
    %v965 = vpop.f32.mrb[0].mxu0
    %v966 = vpop.f32.mrb[0].mxu0
    %967 = vdwg.mxu0
    %968 = vmatprep.subr.bf16.mxu0 %v189
    %969 = vmatpush1.bf16.msra.mxu0 %v188
    %970 = vmatprep.subr.bf16.mxu0 %v193
    %971 = vmatpush1.bf16.msra.mxu0 %v192
    %972 = vmatprep.subr.bf16.mxu0 %v197
    %973 = vmatpush1.bf16.msra.mxu0 %v196
    %974 = vmatprep.subr.bf16.mxu0 %v201
    %975 = vmatpush1.bf16.msra.mxu0 %v200
    %976 = vmatprep.subr.bf16.mxu0 %v205
    %977 = vmatpush1.bf16.msra.mxu0 %v204
    %978 = vmatprep.subr.bf16.mxu0 %v209
    %979 = vmatpush1.bf16.msra.mxu0 %v208
    %980 = vmatprep.subr.bf16.mxu0 %v213
    %981 = vmatpush1.bf16.msra.mxu0 %v212
    %982 = vmatprep.subr.bf16.mxu0 %v217
    %983 = vmatpush1.bf16.msra.mxu0 %v216
    %984 = vmatprep.subr.bf16.mxu0 0
    %985 = vmatpush1.bf16.msra.mxu0 0
    %986 = vmatprep.subr.bf16.mxu0 0
    %987 = vmatpush1.bf16.msra.mxu0 0
    %988 = vmatprep.subr.bf16.mxu0 0
    %989 = vmatpush1.bf16.msra.mxu0 0
    %990 = vmatprep.subr.bf16.mxu0 0
    %991 = vmatpush1.bf16.msra.mxu0 0
    %992 = vmatprep.subr.bf16.mxu0 0
    %993 = vmatpush1.bf16.msra.mxu0 0
    %994 = vmatprep.subr.bf16.mxu0 0
    %995 = vmatpush1.bf16.msra.mxu0 0
    %996 = vmatprep.subr.bf16.mxu0 0
    %997 = vmatpush1.bf16.msra.mxu0 0
    %998 = vmatprep.subr.bf16.mxu0 0
    %999 = vmatpush1.bf16.msra.mxu0 0
    %1000 = vmatprep.mubr.bf16.mxu0 0
    %1001 = vmatmul.mubr.bf16.gmra.mrb[0].mxu0 %v902
    %v1002 = vpop.f32.mrb[0].mxu0
    %v1003 = vadd.f32 %v920, %v1002
    %v1004 = vpop.f32.mrb[0].mxu0
    %v1005 = vadd.f32 %v922, %v1004
    %v1006 = vpop.f32.mrb[0].mxu0
    %v1007 = vpop.f32.mrb[0].mxu0
    %1008 = vdwg.mxu0
    %v1009 = vxor.u32 %v962, 2147483648
    %v1010 = vxor.u32 %v964, 2147483648
    %v1011 = vxor.u32 %v1003, 2147483648
    %v1012 = vmul.f32 %v1009, 1.442695
    %v1013 = vpow.pop %v1012
    %v1014 = vmul.f32 %v1010, 1.442695
    %v1015 = vpow.pop %v1014
    %v1016 = vmul.f32 %v1011, 1.442695
    %v1017 = vpow.pop %v1016
    %v1018 = vadd.f32 %v1013, 1.0
    %v1019 = vadd.f32 %v1015, 1.0
    %v1020 = vadd.f32 %v1017, 1.0
    %v1021 = vrcp.pop %v1018
    %v1022 = vmul.f32 1.0, %v1021
    %v1023 = vrcp.pop %v1019
    %v1024 = vmul.f32 1.0, %v1023
    %v1025 = vrcp.pop %v1020
    %v1026 = vmul.f32 1.0, %v1025
    %v1027 = vtanh.pop %v1005
    %v1028 = vmul.f32 %v1024, %v899
    %v1029 = vmul.f32 %v1022, %v1027
    %v1030 = vadd.f32 %v1028, %v1029
    %v1031 = vtanh.pop %v1030
    %v1032 = vmul.f32 %v1026, %v1031
    %v1033 = vpack.c.bf16 %v1032, %v1032
    %s1034 = scalar_lea.vmem %s0, 56
    %v1035 = vld [vmem:[%s1034] sm:$0xff]
    %v1037 = vcombine.high %v1035, %v1035
    %v1039 = vunpack.c.l.s4 1983009808
    %v1040 = vunpack.c.0.s8 %v1039
    %v1041 = vlaneseq
    %v1042 = vshrl.u32 %v1041, 7
    %v1043 = vsub.s32 %v1040, %v1042
    %v1044 = vrot.slane %v1035, %v1043
    %v1046 = vunpack.c.l.s4 1983009808
    %v1047 = vunpack.c.0.s8 %v1046
    %v1048 = vlaneseq
    %v1049 = vshrl.u32 %v1048, 7
    %v1050 = vsub.s32 %v1047, %v1049
    %v1051 = vrot.slane %v1037, %v1050
    %v1052 = vcombine.high %v1044, %v1044
    %v1053 = vcombine.high %v1051, %v1051
    %1058 = vmatprep.subr.bf16.mxu0 %v187
    %1059 = vmatpush1.bf16.msra.mxu0 %v186
    %1060 = vmatprep.subr.bf16.mxu0 %v191
    %1061 = vmatpush1.bf16.msra.mxu0 %v190
    %1062 = vmatprep.subr.bf16.mxu0 %v195
    %1063 = vmatpush1.bf16.msra.mxu0 %v194
    %1064 = vmatprep.subr.bf16.mxu0 %v199
    %1065 = vmatpush1.bf16.msra.mxu0 %v198
    %1066 = vmatprep.subr.bf16.mxu0 %v203
    %1067 = vmatpush1.bf16.msra.mxu0 %v202
    %1068 = vmatprep.subr.bf16.mxu0 %v207
    %1069 = vmatpush1.bf16.msra.mxu0 %v206
    %1070 = vmatprep.subr.bf16.mxu0 %v211
    %1071 = vmatpush1.bf16.msra.mxu0 %v210
    %1072 = vmatprep.subr.bf16.mxu0 %v215
    %1073 = vmatpush1.bf16.msra.mxu0 %v214
    %1074 = vmatprep.subr.bf16.mxu0 0
    %1075 = vmatpush1.bf16.msra.mxu0 0
    %1076 = vmatprep.subr.bf16.mxu0 0
    %1077 = vmatpush1.bf16.msra.mxu0 0
    %1078 = vmatprep.subr.bf16.mxu0 0
    %1079 = vmatpush1.bf16.msra.mxu0 0
    %1080 = vmatprep.subr.bf16.mxu0 0
    %1081 = vmatpush1.bf16.msra.mxu0 0
    %1082 = vmatprep.subr.bf16.mxu0 0
    %1083 = vmatpush1.bf16.msra.mxu0 0
    %1084 = vmatprep.subr.bf16.mxu0 0
    %1085 = vmatpush1.bf16.msra.mxu0 0
    %1086 = vmatprep.subr.bf16.mxu0 0
    %1087 = vmatpush1.bf16.msra.mxu0 0
    %1088 = vmatprep.subr.bf16.mxu0 0
    %1089 = vmatpush1.bf16.msra.mxu0 0
    %1090 = vmatprep.mubr.bf16.mxu0 0
    %1091 = vmatmul.mubr.bf16.gmra.mrb[0].mxu0 %v1033
    %v1092 = vpop.f32.mrb[0].mxu0
    %v1093 = vadd.f32 %v1044, %v1092
    %v1094 = vpop.f32.mrb[0].mxu0
    %v1095 = vadd.f32 %v1052, %v1094
    %v1096 = vpop.f32.mrb[0].mxu0
    %v1097 = vpop.f32.mrb[0].mxu0
    %1098 = vdwg.mxu0
    %1099 = vmatprep.subr.bf16.mxu0 %v189
    %1100 = vmatpush1.bf16.msra.mxu0 %v188
    %1101 = vmatprep.subr.bf16.mxu0 %v193
    %1102 = vmatpush1.bf16.msra.mxu0 %v192
    %1103 = vmatprep.subr.bf16.mxu0 %v197
    %1104 = vmatpush1.bf16.msra.mxu0 %v196
    %1105 = vmatprep.subr.bf16.mxu0 %v201
    %1106 = vmatpush1.bf16.msra.mxu0 %v200
    %1107 = vmatprep.subr.bf16.mxu0 %v205
    %1108 = vmatpush1.bf16.msra.mxu0 %v204
    %1109 = vmatprep.subr.bf16.mxu0 %v209
    %1110 = vmatpush1.bf16.msra.mxu0 %v208
    %1111 = vmatprep.subr.bf16.mxu0 %v213
    %1112 = vmatpush1.bf16.msra.mxu0 %v212
    %1113 = vmatprep.subr.bf16.mxu0 %v217
    %1114 = vmatpush1.bf16.msra.mxu0 %v216
    %1115 = vmatprep.subr.bf16.mxu0 0
    %1116 = vmatpush1.bf16.msra.mxu0 0
    %1117 = vmatprep.subr.bf16.mxu0 0
    %1118 = vmatpush1.bf16.msra.mxu0 0
    %1119 = vmatprep.subr.bf16.mxu0 0
    %1120 = vmatpush1.bf16.msra.mxu0 0
    %1121 = vmatprep.subr.bf16.mxu0 0
    %1122 = vmatpush1.bf16.msra.mxu0 0
    %1123 = vmatprep.subr.bf16.mxu0 0
    %1124 = vmatpush1.bf16.msra.mxu0 0
    %1125 = vmatprep.subr.bf16.mxu0 0
    %1126 = vmatpush1.bf16.msra.mxu0 0
    %1127 = vmatprep.subr.bf16.mxu0 0
    %1128 = vmatpush1.bf16.msra.mxu0 0
    %1129 = vmatprep.subr.bf16.mxu0 0
    %1130 = vmatpush1.bf16.msra.mxu0 0
    %1131 = vmatprep.mubr.bf16.mxu0 0
    %1132 = vmatmul.mubr.bf16.gmra.mrb[0].mxu0 %v1033
    %v1133 = vpop.f32.mrb[0].mxu0
    %v1134 = vadd.f32 %v1051, %v1133
    %v1135 = vpop.f32.mrb[0].mxu0
    %v1136 = vadd.f32 %v1053, %v1135
    %v1137 = vpop.f32.mrb[0].mxu0
    %v1138 = vpop.f32.mrb[0].mxu0
    %1139 = vdwg.mxu0
    %v1140 = vxor.u32 %v1093, 2147483648
    %v1141 = vxor.u32 %v1095, 2147483648
    %v1142 = vxor.u32 %v1134, 2147483648
    %v1143 = vmul.f32 %v1140, 1.442695
    %v1144 = vpow.pop %v1143
    %v1145 = vmul.f32 %v1141, 1.442695
    %v1146 = vpow.pop %v1145
    %v1147 = vmul.f32 %v1142, 1.442695
    %v1148 = vpow.pop %v1147
    %v1149 = vadd.f32 %v1144, 1.0
    %v1150 = vadd.f32 %v1146, 1.0
    %v1151 = vadd.f32 %v1148, 1.0
    %v1152 = vrcp.pop %v1149
    %v1153 = vmul.f32 1.0, %v1152
    %v1154 = vrcp.pop %v1150
    %v1155 = vmul.f32 1.0, %v1154
    %v1156 = vrcp.pop %v1151
    %v1157 = vmul.f32 1.0, %v1156
    %v1158 = vtanh.pop %v1136
    %v1159 = vmul.f32 %v1155, %v1030
    %v1160 = vmul.f32 %v1153, %v1158
    %v1161 = vadd.f32 %v1159, %v1160
    %v1162 = vtanh.pop %v1161
    %v1163 = vmul.f32 %v1157, %v1162
    %v1164 = vpack.c.bf16 %v1163, %v1163
    %s1165 = scalar_lea.vmem %s0, 64
    %v1166 = vld [vmem:[%s1165] sm:$0xff]
    %v1168 = vcombine.high %v1166, %v1166
    %v1170 = vunpack.c.l.s4 1983009808
    %v1171 = vunpack.c.0.s8 %v1170
    %v1172 = vlaneseq
    %v1173 = vshrl.u32 %v1172, 7
    %v1174 = vsub.s32 %v1171, %v1173
    %v1175 = vrot.slane %v1166, %v1174
    %v1177 = vunpack.c.l.s4 1983009808
    %v1178 = vunpack.c.0.s8 %v1177
    %v1179 = vlaneseq
    %v1180 = vshrl.u32 %v1179, 7
    %v1181 = vsub.s32 %v1178, %v1180
    %v1182 = vrot.slane %v1168, %v1181
    %v1183 = vcombine.high %v1175, %v1175
    %v1184 = vcombine.high %v1182, %v1182
    %1189 = vmatprep.subr.bf16.mxu0 %v187
    %1190 = vmatpush1.bf16.msra.mxu0 %v186
    %1191 = vmatprep.subr.bf16.mxu0 %v191
    %1192 = vmatpush1.bf16.msra.mxu0 %v190
    %1193 = vmatprep.subr.bf16.mxu0 %v195
    %1194 = vmatpush1.bf16.msra.mxu0 %v194
    %1195 = vmatprep.subr.bf16.mxu0 %v199
    %1196 = vmatpush1.bf16.msra.mxu0 %v198
    %1197 = vmatprep.subr.bf16.mxu0 %v203
    %1198 = vmatpush1.bf16.msra.mxu0 %v202
    %1199 = vmatprep.subr.bf16.mxu0 %v207
    %1200 = vmatpush1.bf16.msra.mxu0 %v206
    %1201 = vmatprep.subr.bf16.mxu0 %v211
    %1202 = vmatpush1.bf16.msra.mxu0 %v210
    %1203 = vmatprep.subr.bf16.mxu0 %v215
    %1204 = vmatpush1.bf16.msra.mxu0 %v214
    %1205 = vmatprep.subr.bf16.mxu0 0
    %1206 = vmatpush1.bf16.msra.mxu0 0
    %1207 = vmatprep.subr.bf16.mxu0 0
    %1208 = vmatpush1.bf16.msra.mxu0 0
    %1209 = vmatprep.subr.bf16.mxu0 0
    %1210 = vmatpush1.bf16.msra.mxu0 0
    %1211 = vmatprep.subr.bf16.mxu0 0
    %1212 = vmatpush1.bf16.msra.mxu0 0
    %1213 = vmatprep.subr.bf16.mxu0 0
    %1214 = vmatpush1.bf16.msra.mxu0 0
    %1215 = vmatprep.subr.bf16.mxu0 0
    %1216 = vmatpush1.bf16.msra.mxu0 0
    %1217 = vmatprep.subr.bf16.mxu0 0
    %1218 = vmatpush1.bf16.msra.mxu0 0
    %1219 = vmatprep.subr.bf16.mxu0 0
    %1220 = vmatpush1.bf16.msra.mxu0 0
    %1221 = vmatprep.mubr.bf16.mxu0 0
    %1222 = vmatmul.mubr.bf16.gmra.mrb[0].mxu0 %v1164
    %v1223 = vpop.f32.mrb[0].mxu0
    %v1224 = vadd.f32 %v1175, %v1223
    %v1225 = vpop.f32.mrb[0].mxu0
    %v1226 = vadd.f32 %v1183, %v1225
    %v1227 = vpop.f32.mrb[0].mxu0
    %v1228 = vpop.f32.mrb[0].mxu0
    %1229 = vdwg.mxu0
    %1230 = vmatprep.subr.bf16.mxu0 %v189
    %1231 = vmatpush1.bf16.msra.mxu0 %v188
    %1232 = vmatprep.subr.bf16.mxu0 %v193
    %1233 = vmatpush1.bf16.msra.mxu0 %v192
    %1234 = vmatprep.subr.bf16.mxu0 %v197
    %1235 = vmatpush1.bf16.msra.mxu0 %v196
    %1236 = vmatprep.subr.bf16.mxu0 %v201
    %1237 = vmatpush1.bf16.msra.mxu0 %v200
    %1238 = vmatprep.subr.bf16.mxu0 %v205
    %1239 = vmatpush1.bf16.msra.mxu0 %v204
    %1240 = vmatprep.subr.bf16.mxu0 %v209
    %1241 = vmatpush1.bf16.msra.mxu0 %v208
    %1242 = vmatprep.subr.bf16.mxu0 %v213
    %1243 = vmatpush1.bf16.msra.mxu0 %v212
    %1244 = vmatprep.subr.bf16.mxu0 %v217
    %1245 = vmatpush1.bf16.msra.mxu0 %v216
    %1246 = vmatprep.subr.bf16.mxu0 0
    %1247 = vmatpush1.bf16.msra.mxu0 0
    %1248 = vmatprep.subr.bf16.mxu0 0
    %1249 = vmatpush1.bf16.msra.mxu0 0
    %1250 = vmatprep.subr.bf16.mxu0 0
    %1251 = vmatpush1.bf16.msra.mxu0 0
    %1252 = vmatprep.subr.bf16.mxu0 0
    %1253 = vmatpush1.bf16.msra.mxu0 0
    %1254 = vmatprep.subr.bf16.mxu0 0
    %1255 = vmatpush1.bf16.msra.mxu0 0
    %1256 = vmatprep.subr.bf16.mxu0 0
    %1257 = vmatpush1.bf16.msra.mxu0 0
    %1258 = vmatprep.subr.bf16.mxu0 0
    %1259 = vmatpush1.bf16.msra.mxu0 0
    %1260 = vmatprep.subr.bf16.mxu0 0
    %1261 = vmatpush1.bf16.msra.mxu0 0
    %1262 = vmatprep.mubr.bf16.mxu0 0
    %1263 = vmatmul.mubr.bf16.gmra.mrb[0].mxu0 %v1164
    %v1264 = vpop.f32.mrb[0].mxu0
    %v1265 = vadd.f32 %v1182, %v1264
    %v1266 = vpop.f32.mrb[0].mxu0
    %v1267 = vadd.f32 %v1184, %v1266
    %v1268 = vpop.f32.mrb[0].mxu0
    %v1269 = vpop.f32.mrb[0].mxu0
    %1270 = vdwg.mxu0
    %v1271 = vxor.u32 %v1224, 2147483648
    %v1272 = vxor.u32 %v1226, 2147483648
    %v1273 = vxor.u32 %v1265, 2147483648
    %v1274 = vmul.f32 %v1271, 1.442695
    %v1275 = vpow.pop %v1274
    %v1276 = vmul.f32 %v1272, 1.442695
    %v1277 = vpow.pop %v1276
    %v1278 = vmul.f32 %v1273, 1.442695
    %v1279 = vpow.pop %v1278
    %v1280 = vadd.f32 %v1275, 1.0
    %v1281 = vadd.f32 %v1277, 1.0
    %v1282 = vadd.f32 %v1279, 1.0
    %v1283 = vrcp.pop %v1280
    %v1284 = vmul.f32 1.0, %v1283
    %v1285 = vrcp.pop %v1281
    %v1286 = vmul.f32 1.0, %v1285
    %v1287 = vrcp.pop %v1282
    %v1288 = vmul.f32 1.0, %v1287
    %v1289 = vtanh.pop %v1267
    %v1290 = vmul.f32 %v1286, %v1161
    %v1291 = vmul.f32 %v1284, %v1289
    %v1292 = vadd.f32 %v1290, %v1291
    %v1293 = vtanh.pop %v1292
    %v1294 = vmul.f32 %v1288, %v1293
    %v1295 = vld [vmem:[%s2] sm:$0xff]
    %v1296 = vld [vmem:[%s2 + $0x8] sm:$0xff]
    %v1297 = vld [vmem:[%s2 + $0x10] sm:$0xff]
    %v1298 = vld [vmem:[%s2 + $0x18] sm:$0xff]
    %v1299 = vld [vmem:[%s2 + $0x20] sm:$0xff]
    %v1300 = vld [vmem:[%s2 + $0x28] sm:$0xff]
    %v1301 = vld [vmem:[%s2 + $0x30] sm:$0xff]
    %v1302 = vld [vmem:[%s2 + $0x38] sm:$0xff]
    %v1303 = vld [vmem:[%s2 + $0x40] sm:$0xff]
    %v1304 = vld [vmem:[%s2 + $0x48] sm:$0xff]
    %v1305 = vld [vmem:[%s2 + $0x50] sm:$0xff]
    %v1306 = vld [vmem:[%s2 + $0x58] sm:$0xff]
    %v1307 = vld [vmem:[%s2 + $0x60] sm:$0xff]
    %v1308 = vld [vmem:[%s2 + $0x68] sm:$0xff]
    %v1309 = vld [vmem:[%s2 + $0x70] sm:$0xff]
    %v1310 = vld [vmem:[%s2 + $0x78] sm:$0xff]
    %v1311 = vld [vmem:[#allocation2] sm:$0x1]
    %v1313 = vlaneseq
    %v1314 = vshrl.u32 %v1313, 7
    %v1315 = vsub.s32 0, %v1314
    %v1316 = vrot.slane %v1311, %v1315
    %1318 = vmatprep.subr.mxu0 0.0
    %1319 = vmatpush1.msra.mxu0 %v1295
    %1320 = vmatprep.subr.mxu0 0.0
    %1321 = vmatpush1.msra.mxu0 %v1296
    %1322 = vmatprep.subr.mxu0 0.0
    %1323 = vmatpush1.msra.mxu0 %v1297
    %1324 = vmatprep.subr.mxu0 0.0
    %1325 = vmatpush1.msra.mxu0 %v1298
    %1326 = vmatprep.subr.mxu0 0.0
    %1327 = vmatpush1.msra.mxu0 %v1299
    %1328 = vmatprep.subr.mxu0 0.0
    %1329 = vmatpush1.msra.mxu0 %v1300
    %1330 = vmatprep.subr.mxu0 0.0
    %1331 = vmatpush1.msra.mxu0 %v1301
    %1332 = vmatprep.subr.mxu0 0.0
    %1333 = vmatpush1.msra.mxu0 %v1302
    %1334 = vmatprep.subr.mxu0 0.0
    %1335 = vmatpush1.msra.mxu0 %v1303
    %1336 = vmatprep.subr.mxu0 0.0
    %1337 = vmatpush1.msra.mxu0 %v1304
    %1338 = vmatprep.subr.mxu0 0.0
    %1339 = vmatpush1.msra.mxu0 %v1305
    %1340 = vmatprep.subr.mxu0 0.0
    %1341 = vmatpush1.msra.mxu0 %v1306
    %1342 = vmatprep.subr.mxu0 0.0
    %1343 = vmatpush1.msra.mxu0 %v1307
    %1344 = vmatprep.subr.mxu0 0.0
    %1345 = vmatpush1.msra.mxu0 %v1308
    %1346 = vmatprep.subr.mxu0 0.0
    %1347 = vmatpush1.msra.mxu0 %v1309
    %1348 = vmatprep.subr.mxu0 0.0
    %1349 = vmatpush1.msra.mxu0 %v1310
    %1350 = vmatprep.subr.mxu0 0.0
    %1351 = vmatpush1.msra.mxu0 0.0
    %1352 = vmatprep.subr.mxu0 0.0
    %1353 = vmatpush1.msra.mxu0 0.0
    %1354 = vmatprep.subr.mxu0 0.0
    %1355 = vmatpush1.msra.mxu0 0.0
    %1356 = vmatprep.subr.mxu0 0.0
    %1357 = vmatpush1.msra.mxu0 0.0
    %1358 = vmatprep.subr.mxu0 0.0
    %1359 = vmatpush1.msra.mxu0 0.0
    %1360 = vmatprep.subr.mxu0 0.0
    %1361 = vmatpush1.msra.mxu0 0.0
    %1362 = vmatprep.subr.mxu0 0.0
    %1363 = vmatpush1.msra.mxu0 0.0
    %1364 = vmatprep.subr.mxu0 0.0
    %1365 = vmatpush1.msra.mxu0 0.0
    %1366 = vmatprep.subr.mxu0 0.0
    %1367 = vmatpush1.msra.mxu0 0.0
    %1368 = vmatprep.subr.mxu0 0.0
    %1369 = vmatpush1.msra.mxu0 0.0
    %1370 = vmatprep.subr.mxu0 0.0
    %1371 = vmatpush1.msra.mxu0 0.0
    %1372 = vmatprep.subr.mxu0 0.0
    %1373 = vmatpush1.msra.mxu0 0.0
    %1374 = vmatprep.subr.mxu0 0.0
    %1375 = vmatpush1.msra.mxu0 0.0
    %1376 = vmatprep.subr.mxu0 0.0
    %1377 = vmatpush1.msra.mxu0 0.0
    %1378 = vmatprep.subr.mxu0 0.0
    %1379 = vmatpush1.msra.mxu0 0.0
    %1380 = vmatprep.subr.mxu0 0.0
    %1381 = vmatpush1.msra.mxu0 0.0
    %1382 = vmatprep.mubr.f32.mxu0 0.0
    %1383 = vmatmul.mubr.f32.gmra.mrb[0].mxu0 %v1294
    %v1384 = vpop.f32.mrb[0].mxu0
    %v1385 = vadd.f32 %v1316, %v1384
    %v1386 = vpop.f32.mrb[0].mxu0
    %1387 = vdwg.mxu0
    %vm1388 = vcmask 1024
    %1389 = vst.msk [vmem:[%s4] sm:$0x3] %vm1388, %v1385
    // Predicated region
    $region22: #{tpu_custom_call.1} parent=1 // pred_check
      _
    $region23: #{tpu_custom_call.1} parent=1 // pred_check_branch
      %1391 = sbr.rel (0) target = $region25
    $region24: #{tpu_custom_call.1} parent=1 // pred_region
      _
    $region25: #{tpu_custom_call.1} parent=1 // pred_fallthru
      _
    // Predicated region
    $region26: #{tpu_custom_call.1} parent=1 // pred_check
      _
    $region27: #{tpu_custom_call.1} parent=1 // pred_check_branch
      %1393 = sbr.rel (0) target = $region29
    $region28: #{tpu_custom_call.1} parent=1 // pred_region
      _
    $region29: #{tpu_custom_call.1} parent=1 // pred_fallthru
      _
    %1394 = vsyncpa [#allocation4], 1

</llo_original>
